<compile_context>
chip_gen: v7x
topology: tpu7x:2x2x1
jax: 0.10.0
libtpu: 0.0.40
codegen_flags: <defaults>
</compile_context>

<pallas_src>
import jax
import jax.numpy as jnp
from jax.experimental import pallas as pl
from jax.experimental.pallas import tpu as pltpu


def attention_kernel(q_ref, img_ref, wq_ref, bq_ref, wi_ref, ws_ref, bs_ref,
                     wf_ref, bf_ref, out_ref):
    q = q_ref[...]                       # (TB, D)
    img = img_ref[...]                   # (TB, S, D)
    TB, S, D = img.shape
    A = ws_ref.shape[1]

    wq = wq_ref[...]                     # (D, 2A)
    bq = bq_ref[...]                     # (1, 2A)
    ws = ws_ref[...]                     # (2, A)
    bs = bs_ref[...]                     # (1, 2)

    # Query-independent image projections for BOTH hops, fused in one matmul
    # (single MXU pass over the (TB*S, D) LHS instead of two).
    img_flat = img.reshape(TB * S, D)
    ie_both = jnp.dot(img_flat, wi_ref[...],
                      preferred_element_type=jnp.float32)        # (TB*S, 2A)
    ie_both = ie_both.reshape(TB, S, 2 * A)
    ie1 = ie_both[:, :, :A]
    ie2 = ie_both[:, :, A:]

    def hop(query, w_q, b_q, ie, w_s_row, b_s):
        # query: (TB, D) -> (TB, A)
        qe = jnp.dot(query, w_q, preferred_element_type=jnp.float32) + b_q
        # TODO(synk): nn.Dropout is identity in eval mode; training dropout not modeled.
        h = jnp.tanh(qe[:, None, :] + ie)                         # (TB, S, A)
        # Score: N=1 MXU matmul replaced by VPU multiply + lane-axis reduce.
        s = jnp.sum(h * w_s_row, axis=-1) + b_s                   # (TB, S)
        # Softmax over S (lane axis), reciprocal-multiply instead of divide.
        m = jnp.max(s, axis=-1, keepdims=True)                    # (TB, 1)
        e = jnp.exp(s - m)                                        # (TB, S)
        denom = jnp.sum(e, axis=-1, keepdims=True)                # (TB, 1)
        # approx=True would route this to the otherwise-idle EUP slot; exact
        # reciprocal is kept so the strict f32 reference tolerance holds.
        p = e * pl.reciprocal(denom)                              # (TB, S)
        # Attention pooling: sum_S p * img  (broadcast mul + sublane reduce).
        att = jnp.sum(p[:, :, None] * img, axis=1)                # (TB, D)
        return att

    w13_row = ws[0:1, :].reshape(1, 1, A)
    w23_row = ws[1:2, :].reshape(1, 1, A)

    att1 = hop(q, wq[:, :A], bq[:, :A], ie1, w13_row, bs[:, 0:1])
    u1 = q + att1
    att2 = hop(u1, wq[:, A:], bq[:, A:], ie2, w23_row, bs[:, 1:2])
    u2 = u1 + att2

    score = jnp.dot(u2, wf_ref[...], preferred_element_type=jnp.float32) + bf_ref[...]
    out_ref[...] = score.astype(out_ref.dtype)


def _round_up(x, m):
    return ((x + m - 1) // m) * m


def _pick_tb(B, S, D, A, Op, block_b, budget_bytes):
    """Largest batch block (multiple of 8) whose VMEM footprint fits budget."""
    f32 = 4
    # Resident weights (counted x2 buffers to be conservative).
    weight_bytes = 2 * f32 * (2 * D * 2 * A + D * Op + 4 * A + 2 * A + 2 + Op)
    # Per-batch-row bytes: pipelined blocks (x2 buffers) + large intermediates.
    per_row = f32 * (2 * S * D + 2 * D + 2 * Op          # img / ques / out blocks
                     + S * 2 * A + S * A + S * D          # ie_both, h, pooling tmp
                     + 4 * D + 2 * S + 2 * A + Op)        # small vectors
    avail = budget_bytes - weight_bytes
    tb = (avail // per_row) if avail > per_row else 8
    tb = max(8, min(block_b, _round_up(B, 8), (tb // 8) * 8))
    est = weight_bytes + tb * per_row
    return int(tb), int(est)


def attention_forward(ques_feat, img_feat, packed, *, block_b=256,
                      vmem_budget_bytes=48 << 20):
    B, D = ques_feat.shape
    _, S, _ = img_feat.shape
    A = packed["ws"].shape[1]
    O = packed["wf"].shape[1]

    # Lane-dense output: pad O up to a multiple of 128 so the output block
    # stores full, unmasked vregs (biggest observed store-density lever).
    Op = _round_up(O, 128)
    wf = packed["wf"]
    bf = packed["bf"]
    if Op != O:
        wf = jnp.pad(wf, ((0, 0), (0, Op - O)))
        bf = jnp.pad(bf, ((0, 0), (0, Op - O)))

    # Batch block: multiple of 8 sublanes, VMEM-budget aware (keeps the double
    # buffered img block + intermediates under the scoped limit on v7x too).
    TB, vmem_est = _pick_tb(B, S, D, A, Op, block_b, vmem_budget_bytes)
    Bp = _round_up(B, TB)
    if Bp != B:
        ques_feat = jnp.pad(ques_feat, ((0, Bp - B), (0, 0)))
        img_feat = jnp.pad(img_feat, ((0, Bp - B), (0, 0), (0, 0)))

    def resident(arr):
        # Block index never changes -> weight stays resident across the grid.
        return pl.BlockSpec(arr.shape, lambda b: tuple(0 for _ in arr.shape))

    weights = (packed["wq"], packed["bq"], packed["wi"], packed["ws"],
               packed["bs"], wf, bf)

    in_specs = [
        pl.BlockSpec((TB, D), lambda b: (b, 0)),         # ques_feat block
        pl.BlockSpec((TB, S, D), lambda b: (b, 0, 0)),   # img_feat block
    ] + [resident(w) for w in weights]

    vmem_limit = int(min(56 << 20, max(32 << 20, vmem_est + (4 << 20))))

    out = pl.pallas_call(
        attention_kernel,
        out_shape=jax.ShapeDtypeStruct((Bp, Op), jnp.float32),
        grid_spec=pltpu.PrefetchScalarGridSpec(
            num_scalar_prefetch=0,
            grid=(Bp // TB,),
            in_specs=in_specs,
            out_specs=pl.BlockSpec((TB, Op), lambda b: (b, 0)),
        ),
        compiler_params=pltpu.CompilerParams(
            dimension_semantics=("parallel",),
            vmem_limit_bytes=vmem_limit),
    )(ques_feat, img_feat, *weights)
    return out[:B, :O]


def pack_params(params):
    """Pack the 12 PyTorch-style tensors into 7 TPU-friendly blocks."""
    return {
        "wq": jnp.concatenate([params["w11"], params["w21"]], axis=1),   # (D, 2A)
        "bq": jnp.concatenate([params["b11"], params["b21"]], axis=1),   # (1, 2A)
        "wi": jnp.concatenate([params["w12"], params["w22"]], axis=1),   # (D, 2A)
        "ws": jnp.concatenate([params["w13"].T, params["w23"].T], axis=0),  # (2, A)
        "bs": jnp.concatenate([params["b13"], params["b23"]], axis=1),   # (1, 2)
        "wf": params["wf"],
        "bf": params["bf"],
    }


def attention_reference(ques_feat, img_feat, params):
    """Pure-JAX reference mirroring the PyTorch forward (eval mode)."""
    def attend(query, img, w_q, b_q, w_i, w_s, b_s):
        qe = query @ w_q + b_q                        # (B, A)
        ie = img @ w_i                                # (B, S, A)
        h = jnp.tanh(qe[:, None, :] + ie)             # (B, S, A)
        s = (h @ w_s + b_s)[..., 0]                   # (B, S)
        p = jax.nn.softmax(s, axis=-1)                # (B, S)
        return jnp.einsum("bs,bsd->bd", p, img)       # (B, D)

    att1 = attend(ques_feat, img_feat, params["w11"], params["b11"],
                  params["w12"], params["w13"], params["b13"])
    u1 = ques_feat + att1
    att2 = attend(u1, img_feat, params["w21"], params["b21"],
                  params["w22"], params["w23"], params["b23"])
    u2 = u1 + att2
    return u2 @ params["wf"] + params["bf"]


def init_params(key, input_size, att_size, output_size):
    keys = jax.random.split(key, 12)
    n = lambda k, shape: (0.05 * jax.random.normal(k, shape)).astype(jnp.float32)
    return {
        "w11": n(keys[0], (input_size, att_size)),
        "b11": n(keys[1], (1, att_size)),
        "w12": n(keys[2], (input_size, att_size)),
        "w13": n(keys[3], (att_size, 1)),
        "b13": n(keys[4], (1, 1)),
        "w21": n(keys[5], (input_size, att_size)),
        "b21": n(keys[6], (1, att_size)),
        "w22": n(keys[7], (input_size, att_size)),
        "w23": n(keys[8], (att_size, 1)),
        "b23": n(keys[9], (1, 1)),
        "wf": n(keys[10], (input_size, output_size)),
        "bf": n(keys[11], (1, output_size)),
    }


if __name__ == "__main__":
    B, input_size, att_size, img_seq_size, output_size = 2, 32, 16, 8, 8

    key = jax.random.PRNGKey(0)
    k_q, k_i, k_p = jax.random.split(key, 3)
    ques_feat = jax.random.normal(k_q, (B, input_size), dtype=jnp.float32)
    img_feat = jax.random.normal(k_i, (B, img_seq_size, input_size), dtype=jnp.float32)
    params = init_params(k_p, input_size, att_size, output_size)
    packed = pack_params(params)

    out = attention_forward(ques_feat, img_feat, packed)
    out = jax.block_until_ready(out)

    ref = attention_reference(ques_feat, img_feat, params)
    assert out.shape == (B, output_size)
    assert jnp.allclose(out, ref, rtol=1e-4, atol=1e-5), "mismatch vs reference"

    print("KERNEL_OK")
</pallas_src>

<mosaic_0001>
module attributes {stable_mosaic.version = 11 : i64} {
  func.func @attention_kernel(%arg0: i32, %arg1: memref<8x32xf32, #tpu.memory_space<vmem>>, %arg2: memref<8x8x32xf32, #tpu.memory_space<vmem>>, %arg3: memref<32x32xf32, #tpu.memory_space<vmem>>, %arg4: memref<1x32xf32, #tpu.memory_space<vmem>>, %arg5: memref<32x32xf32, #tpu.memory_space<vmem>>, %arg6: memref<2x16xf32, #tpu.memory_space<vmem>>, %arg7: memref<1x2xf32, #tpu.memory_space<vmem>>, %arg8: memref<32x128xf32, #tpu.memory_space<vmem>>, %arg9: memref<1x128xf32, #tpu.memory_space<vmem>>, %arg10: memref<8x128xf32, #tpu.memory_space<vmem>>) attributes {dimension_semantics = [#tpu.dimension_semantics<parallel>], iteration_bounds = array<i64: 1>, scalar_prefetch = 0 : i64, scratch_operands = 0 : i64, tpu.core_type = #tpu.core_type<tc>, window_params = [{transform_indices = @transform_0, window_bounds = array<i64: 8, 32>}, {transform_indices = @transform_1, window_bounds = array<i64: 8, 8, 32>}, {pipeline_mode = #tpu.pipeline_mode<synchronous>, transform_indices = @transform_2, window_bounds = array<i64: 32, 32>}, {pipeline_mode = #tpu.pipeline_mode<synchronous>, transform_indices = @transform_3, window_bounds = array<i64: 1, 32>}, {pipeline_mode = #tpu.pipeline_mode<synchronous>, transform_indices = @transform_4, window_bounds = array<i64: 32, 32>}, {pipeline_mode = #tpu.pipeline_mode<synchronous>, transform_indices = @transform_5, window_bounds = array<i64: 2, 16>}, {pipeline_mode = #tpu.pipeline_mode<synchronous>, transform_indices = @transform_6, window_bounds = array<i64: 1, 2>}, {pipeline_mode = #tpu.pipeline_mode<synchronous>, transform_indices = @transform_7, window_bounds = array<i64: 32, 128>}, {pipeline_mode = #tpu.pipeline_mode<synchronous>, transform_indices = @transform_8, window_bounds = array<i64: 1, 128>}, {transform_indices = @transform_9, window_bounds = array<i64: 8, 128>}]} {
    %c0 = arith.constant 0 : index
    %c0_0 = arith.constant 0 : index
    %0 = vector.load %arg1[%c0, %c0_0] : memref<8x32xf32, #tpu.memory_space<vmem>>, vector<8x32xf32>
    %c0_1 = arith.constant 0 : index
    %c0_2 = arith.constant 0 : index
    %c0_3 = arith.constant 0 : index
    %1 = vector.load %arg2[%c0_1, %c0_2, %c0_3] : memref<8x8x32xf32, #tpu.memory_space<vmem>>, vector<8x8x32xf32>
    %c0_4 = arith.constant 0 : index
    %c0_5 = arith.constant 0 : index
    %2 = vector.load %arg3[%c0_4, %c0_5] : memref<32x32xf32, #tpu.memory_space<vmem>>, vector<32x32xf32>
    %c0_6 = arith.constant 0 : index
    %c0_7 = arith.constant 0 : index
    %3 = vector.load %arg4[%c0_6, %c0_7] : memref<1x32xf32, #tpu.memory_space<vmem>>, vector<1x32xf32>
    %c0_8 = arith.constant 0 : index
    %c0_9 = arith.constant 0 : index
    %4 = vector.load %arg6[%c0_8, %c0_9] : memref<2x16xf32, #tpu.memory_space<vmem>>, vector<2x16xf32>
    %c0_10 = arith.constant 0 : index
    %c0_11 = arith.constant 0 : index
    %5 = vector.load %arg7[%c0_10, %c0_11] : memref<1x2xf32, #tpu.memory_space<vmem>>, vector<1x2xf32>
    %6 = vector.shape_cast %1 : vector<8x8x32xf32> to vector<64x32xf32>
    %c0_12 = arith.constant 0 : index
    %c0_13 = arith.constant 0 : index
    %7 = vector.load %arg5[%c0_12, %c0_13] : memref<32x32xf32, #tpu.memory_space<vmem>>, vector<32x32xf32>
    %cst = arith.constant dense<0.000000e+00> : vector<64x32xf32>
    %8 = tpu.matmul %6, %7, %cst {dimension_numbers = #tpu.dot_dimension_numbers<[1], [0], [0], [1], [0, 0, 1, 1], [], []>} : vector<64x32xf32>, vector<32x32xf32>, vector<64x32xf32> -> vector<64x32xf32>
    %9 = vector.shape_cast %8 : vector<64x32xf32> to vector<8x8x32xf32>
    %10 = vector.extract_strided_slice %9 {offsets = [0, 0, 0], sizes = [8, 8, 16], strides = [1, 1, 1]} : vector<8x8x32xf32> to vector<8x8x16xf32>
    %11 = vector.extract_strided_slice %9 {offsets = [0, 0, 16], sizes = [8, 8, 16], strides = [1, 1, 1]} : vector<8x8x32xf32> to vector<8x8x16xf32>
    %12 = vector.extract_strided_slice %4 {offsets = [0, 0], sizes = [1, 16], strides = [1, 1]} : vector<2x16xf32> to vector<1x16xf32>
    %13 = vector.shape_cast %12 : vector<1x16xf32> to vector<1x1x16xf32>
    %14 = vector.extract_strided_slice %4 {offsets = [1, 0], sizes = [1, 16], strides = [1, 1]} : vector<2x16xf32> to vector<1x16xf32>
    %15 = vector.shape_cast %14 : vector<1x16xf32> to vector<1x1x16xf32>
    %16 = vector.extract_strided_slice %2 {offsets = [0, 0], sizes = [32, 16], strides = [1, 1]} : vector<32x32xf32> to vector<32x16xf32>
    %17 = vector.extract_strided_slice %3 {offsets = [0, 0], sizes = [1, 16], strides = [1, 1]} : vector<1x32xf32> to vector<1x16xf32>
    %18 = vector.extract_strided_slice %5 {offsets = [0, 0], sizes = [1, 1], strides = [1, 1]} : vector<1x2xf32> to vector<1x1xf32>
    %cst_14 = arith.constant dense<0.000000e+00> : vector<8x16xf32>
    %19 = tpu.matmul %0, %16, %cst_14 {dimension_numbers = #tpu.dot_dimension_numbers<[1], [0], [0], [1], [0, 0, 1, 1], [], []>} : vector<8x32xf32>, vector<32x16xf32>, vector<8x16xf32> -> vector<8x16xf32>
    %20 = vector.broadcast %17 : vector<1x16xf32> to vector<8x16xf32>
    %21 = arith.addf %19, %20 : vector<8x16xf32>
    %22 = vector.shape_cast %21 : vector<8x16xf32> to vector<8x1x16xf32>
    %23 = vector.broadcast %22 : vector<8x1x16xf32> to vector<8x8x16xf32>
    %24 = arith.addf %23, %10 : vector<8x8x16xf32>
    %25 = math.tanh %24 : vector<8x8x16xf32>
    %26 = vector.broadcast %13 : vector<1x1x16xf32> to vector<8x8x16xf32>
    %27 = arith.mulf %25, %26 : vector<8x8x16xf32>
    %cst_15 = arith.constant dense<0.000000e+00> : vector<8x8xf32>
    %28 = vector.multi_reduction <add>, %27, %cst_15 [2] : vector<8x8x16xf32> to vector<8x8xf32>
    %29 = vector.broadcast %18 : vector<1x1xf32> to vector<8x8xf32>
    %30 = arith.addf %28, %29 : vector<8x8xf32>
    %cst_16 = arith.constant dense<0xFF800000> : vector<8xf32>
    %31 = vector.multi_reduction <maximumf>, %30, %cst_16 [1] : vector<8x8xf32> to vector<8xf32>
    %32 = vector.shape_cast %31 : vector<8xf32> to vector<8x1xf32>
    %33 = vector.broadcast %32 : vector<8x1xf32> to vector<8x8xf32>
    %34 = arith.subf %30, %33 : vector<8x8xf32>
    %35 = math.exp %34 : vector<8x8xf32>
    %cst_17 = arith.constant dense<0.000000e+00> : vector<8xf32>
    %36 = vector.multi_reduction <add>, %35, %cst_17 [1] : vector<8x8xf32> to vector<8xf32>
    %37 = vector.shape_cast %36 : vector<8xf32> to vector<8x1xf32>
    %38 = tpu.reciprocal %37 : vector<8x1xf32> -> vector<8x1xf32>
    %39 = vector.broadcast %38 : vector<8x1xf32> to vector<8x8xf32>
    %40 = arith.mulf %35, %39 : vector<8x8xf32>
    %41 = vector.shape_cast %40 : vector<8x8xf32> to vector<8x8x1xf32>
    %42 = vector.broadcast %41 : vector<8x8x1xf32> to vector<8x8x32xf32>
    %43 = arith.mulf %42, %1 : vector<8x8x32xf32>
    %cst_18 = arith.constant dense<0.000000e+00> : vector<8x32xf32>
    %44 = vector.multi_reduction <add>, %43, %cst_18 [1] : vector<8x8x32xf32> to vector<8x32xf32>
    %45 = arith.addf %0, %44 : vector<8x32xf32>
    %46 = vector.extract_strided_slice %2 {offsets = [0, 16], sizes = [32, 16], strides = [1, 1]} : vector<32x32xf32> to vector<32x16xf32>
    %47 = vector.extract_strided_slice %3 {offsets = [0, 16], sizes = [1, 16], strides = [1, 1]} : vector<1x32xf32> to vector<1x16xf32>
    %48 = vector.extract_strided_slice %5 {offsets = [0, 1], sizes = [1, 1], strides = [1, 1]} : vector<1x2xf32> to vector<1x1xf32>
    %cst_19 = arith.constant dense<0.000000e+00> : vector<8x16xf32>
    %49 = tpu.matmul %45, %46, %cst_19 {dimension_numbers = #tpu.dot_dimension_numbers<[1], [0], [0], [1], [0, 0, 1, 1], [], []>} : vector<8x32xf32>, vector<32x16xf32>, vector<8x16xf32> -> vector<8x16xf32>
    %50 = vector.broadcast %47 : vector<1x16xf32> to vector<8x16xf32>
    %51 = arith.addf %49, %50 : vector<8x16xf32>
    %52 = vector.shape_cast %51 : vector<8x16xf32> to vector<8x1x16xf32>
    %53 = vector.broadcast %52 : vector<8x1x16xf32> to vector<8x8x16xf32>
    %54 = arith.addf %53, %11 : vector<8x8x16xf32>
    %55 = math.tanh %54 : vector<8x8x16xf32>
    %56 = vector.broadcast %15 : vector<1x1x16xf32> to vector<8x8x16xf32>
    %57 = arith.mulf %55, %56 : vector<8x8x16xf32>
    %cst_20 = arith.constant dense<0.000000e+00> : vector<8x8xf32>
    %58 = vector.multi_reduction <add>, %57, %cst_20 [2] : vector<8x8x16xf32> to vector<8x8xf32>
    %59 = vector.broadcast %48 : vector<1x1xf32> to vector<8x8xf32>
    %60 = arith.addf %58, %59 : vector<8x8xf32>
    %cst_21 = arith.constant dense<0xFF800000> : vector<8xf32>
    %61 = vector.multi_reduction <maximumf>, %60, %cst_21 [1] : vector<8x8xf32> to vector<8xf32>
    %62 = vector.shape_cast %61 : vector<8xf32> to vector<8x1xf32>
    %63 = vector.broadcast %62 : vector<8x1xf32> to vector<8x8xf32>
    %64 = arith.subf %60, %63 : vector<8x8xf32>
    %65 = math.exp %64 : vector<8x8xf32>
    %cst_22 = arith.constant dense<0.000000e+00> : vector<8xf32>
    %66 = vector.multi_reduction <add>, %65, %cst_22 [1] : vector<8x8xf32> to vector<8xf32>
    %67 = vector.shape_cast %66 : vector<8xf32> to vector<8x1xf32>
    %68 = tpu.reciprocal %67 : vector<8x1xf32> -> vector<8x1xf32>
    %69 = vector.broadcast %68 : vector<8x1xf32> to vector<8x8xf32>
    %70 = arith.mulf %65, %69 : vector<8x8xf32>
    %71 = vector.shape_cast %70 : vector<8x8xf32> to vector<8x8x1xf32>
    %72 = vector.broadcast %71 : vector<8x8x1xf32> to vector<8x8x32xf32>
    %73 = arith.mulf %72, %1 : vector<8x8x32xf32>
    %cst_23 = arith.constant dense<0.000000e+00> : vector<8x32xf32>
    %74 = vector.multi_reduction <add>, %73, %cst_23 [1] : vector<8x8x32xf32> to vector<8x32xf32>
    %75 = arith.addf %45, %74 : vector<8x32xf32>
    %c0_24 = arith.constant 0 : index
    %c0_25 = arith.constant 0 : index
    %76 = vector.load %arg8[%c0_24, %c0_25] : memref<32x128xf32, #tpu.memory_space<vmem>>, vector<32x128xf32>
    %cst_26 = arith.constant dense<0.000000e+00> : vector<8x128xf32>
    %77 = tpu.matmul %75, %76, %cst_26 {dimension_numbers = #tpu.dot_dimension_numbers<[1], [0], [0], [1], [0, 0, 1, 1], [], []>} : vector<8x32xf32>, vector<32x128xf32>, vector<8x128xf32> -> vector<8x128xf32>
    %c0_27 = arith.constant 0 : index
    %c0_28 = arith.constant 0 : index
    %78 = vector.load %arg9[%c0_27, %c0_28] : memref<1x128xf32, #tpu.memory_space<vmem>>, vector<1x128xf32>
    %79 = vector.broadcast %78 : vector<1x128xf32> to vector<8x128xf32>
    %80 = arith.addf %77, %79 : vector<8x128xf32>
    %c0_29 = arith.constant 0 : index
    %c0_30 = arith.constant 0 : index
    %81 = vector.load %arg10[%c0_29, %c0_30] : memref<8x128xf32, #tpu.memory_space<vmem>>, vector<8x128xf32>
    tpu.vector_store %arg10[%c0_29, %c0_30], %80 {strides = array<i32>} : memref<8x128xf32, #tpu.memory_space<vmem>>, vector<8x128xf32>,
    return
  }
  func.func @transform_0(%arg0: i32) -> (i32, i32) {
    %c0_i32 = arith.constant 0 : i32
    %c0_i32_0 = arith.constant 0 : i32
    return %arg0, %c0_i32 : i32, i32
  }
  func.func @transform_1(%arg0: i32) -> (i32, i32, i32) {
    %c0_i32 = arith.constant 0 : i32
    %c0_i32_0 = arith.constant 0 : i32
    %c0_i32_1 = arith.constant 0 : i32
    return %arg0, %c0_i32, %c0_i32_0 : i32, i32, i32
  }
  func.func @transform_2(%arg0: i32) -> (i32, i32) {
    %c0_i32 = arith.constant 0 : i32
    %c0_i32_0 = arith.constant 0 : i32
    %c0_i32_1 = arith.constant 0 : i32
    return %c0_i32, %c0_i32_0 : i32, i32
  }
  func.func @transform_3(%arg0: i32) -> (i32, i32) {
    %c0_i32 = arith.constant 0 : i32
    %c0_i32_0 = arith.constant 0 : i32
    %c0_i32_1 = arith.constant 0 : i32
    return %c0_i32, %c0_i32_0 : i32, i32
  }
  func.func @transform_4(%arg0: i32) -> (i32, i32) {
    %c0_i32 = arith.constant 0 : i32
    %c0_i32_0 = arith.constant 0 : i32
    %c0_i32_1 = arith.constant 0 : i32
    return %c0_i32, %c0_i32_0 : i32, i32
  }
  func.func @transform_5(%arg0: i32) -> (i32, i32) {
    %c0_i32 = arith.constant 0 : i32
    %c0_i32_0 = arith.constant 0 : i32
    %c0_i32_1 = arith.constant 0 : i32
    return %c0_i32, %c0_i32_0 : i32, i32
  }
  func.func @transform_6(%arg0: i32) -> (i32, i32) {
    %c0_i32 = arith.constant 0 : i32
    %c0_i32_0 = arith.constant 0 : i32
    %c0_i32_1 = arith.constant 0 : i32
    return %c0_i32, %c0_i32_0 : i32, i32
  }
  func.func @transform_7(%arg0: i32) -> (i32, i32) {
    %c0_i32 = arith.constant 0 : i32
    %c0_i32_0 = arith.constant 0 : i32
    %c0_i32_1 = arith.constant 0 : i32
    return %c0_i32, %c0_i32_0 : i32, i32
  }
  func.func @transform_8(%arg0: i32) -> (i32, i32) {
    %c0_i32 = arith.constant 0 : i32
    %c0_i32_0 = arith.constant 0 : i32
    %c0_i32_1 = arith.constant 0 : i32
    return %c0_i32, %c0_i32_0 : i32, i32
  }
  func.func @transform_9(%arg0: i32) -> (i32, i32) {
    %c0_i32 = arith.constant 0 : i32
    %c0_i32_0 = arith.constant 0 : i32
    return %arg0, %c0_i32 : i32, i32
  }
}

</mosaic_0001>

<llo_original>
// kernel: tpu_custom_call.1
$region0: #{tpu_custom_call.1}
  #allocation0 [shape = 'u32[]', space=smem, size = 0x4, offset = 0x4, fixed_abs, tag = 'smem constant byte address 0x4 - core index']
  #allocation1 [shape = 'u32[144,128]{1,0:T(1,128)}', space=vmem, size = 0x12000, scoped, tag = 'internal scratch']
  %s0 = inlined_call_operand.hbm [shape: f32[8,32], index: 0, kind: input, shape index: {}]
  %s1 = inlined_call_operand.hbm [shape: f32[8,8,32], index: 1, kind: input, shape index: {}]
  %s2 = inlined_call_operand.hbm [shape: f32[32,32], index: 2, kind: input, shape index: {}]
  %s3 = inlined_call_operand.vmem [shape: f32[1,32], index: 3, kind: input, shape index: {}]
  %s4 = inlined_call_operand.hbm [shape: f32[32,32], index: 4, kind: input, shape index: {}]
  %s5 = inlined_call_operand.vmem [shape: f32[2,16], index: 5, kind: input, shape index: {}]
  %s6 = inlined_call_operand.vmem [shape: f32[1,2], index: 6, kind: input, shape index: {}]
  %s7 = inlined_call_operand.hbm [shape: f32[32,128], index: 7, kind: input, shape index: {}]
  %s8 = inlined_call_operand.vmem [shape: f32[1,128], index: 8, kind: input, shape index: {}]
  %s9 = inlined_call_operand.hbm [shape: f32[8,128], index: 9, kind: output, shape index: {}]
  %s10 = sld [smem:[#allocation0]]
  $region66: #{tpu_custom_call.1} parent=0
    _
  %s12 = ssub.s32 1, %s10
  %s13 = scalar_select 0, %s12, %s10
  $region1: #{tpu_custom_call.1} parent=0
    #allocation2 [shape = 'u8[4096]{0}', space=vmem, size = 0x1000, scoped, tag = 'input window, operand 0, single buffered']
    #allocation3 [shape = 's32[1]{0}', space=sflag, size = 0x4, scoped, tag = 'scoped memory for tpu_custom_call.1']
    #allocation4 [shape = 's32[1]{0}', space=sflag, size = 0x4, scoped, tag = 'scoped memory for tpu_custom_call.1']
    #allocation5 [shape = 'u8[32768]{0}', space=vmem, size = 0x8000, scoped, tag = 'input window, operand 1, single buffered']
    #allocation6 [shape = 's32[1]{0}', space=sflag, size = 0x4, scoped, tag = 'scoped memory for tpu_custom_call.1']
    #allocation7 [shape = 'u8[16384]{0}', space=vmem, size = 0x4000, scoped, tag = 'input window, operand 2, single buffered']
    #allocation8 [shape = 'u8[16384]{0}', space=vmem, size = 0x4000, scoped, tag = 'input window, operand 4, single buffered']
    #allocation9 [shape = 's32[1]{0}', space=sflag, size = 0x4, scoped, tag = 'scoped memory for tpu_custom_call.1']
    #allocation10 [shape = 'u8[16384]{0}', space=vmem, size = 0x4000, scoped, tag = 'input window, operand 7, single buffered']
    #allocation11 [shape = 'u8[4096]{0}', space=vmem, size = 0x1000, scoped, tag = 'output window, operand 0, single buffered']
    %14 = vsyncpa [#allocation3], 0
    %15 = vsyncpa [#allocation6], 0
    %16 = vsyncpa [#allocation9], 0
    %17 = vsyncpa [#allocation4], 0
    // Predicated region
    $region2: #{tpu_custom_call.1} parent=1 // pred_check
      _
    $region3: #{tpu_custom_call.1} parent=1 // pred_check_branch
      %19 = sbr.rel (0) target = $region5
    $region4: #{tpu_custom_call.1} parent=1 // pred_region
      %s21 = ssub.s32 128, 128
      %22 = vsyncadd [#allocation3], %s21
      %s24 = sshll.u32 [#allocation2], 4
      %s25 = int_to_ptr.vmem [resolvable:$true] %s24
      %27 = dma.hbm_to_vmem [thread:$0]  %s0, 128, %s25, [#allocation3]
    $region5: #{tpu_custom_call.1} parent=1 // pred_fallthru
      _
    // Predicated region
    $region6: #{tpu_custom_call.1} parent=1 // pred_check
      _
    $region7: #{tpu_custom_call.1} parent=1 // pred_check_branch
      %29 = sbr.rel (0) target = $region9
    $region8: #{tpu_custom_call.1} parent=1 // pred_region
      %s31 = ssub.s32 1024, 1024
      %32 = vsyncadd [#allocation6], %s31
      %s33 = sshll.u32 [#allocation5], 4
      %s34 = int_to_ptr.vmem [resolvable:$true] %s33
      %39 = dma.hbm_to_vmem [thread:$0]  %s1, 1024, %s34, [#allocation6], 128, 128, 8
    $region9: #{tpu_custom_call.1} parent=1 // pred_fallthru
      _
    // Predicated region
    $region10: #{tpu_custom_call.1} parent=1 // pred_check
      _
    $region11: #{tpu_custom_call.1} parent=1 // pred_check_branch
      %41 = sbr.rel (0) target = $region13
    $region12: #{tpu_custom_call.1} parent=1 // pred_region
      %s43 = ssub.s32 512, 512
      %44 = vsyncadd [#allocation6], %s43
      %s45 = sshll.u32 [#allocation7], 4
      %s46 = int_to_ptr.vmem [resolvable:$true] %s45
      %51 = dma.hbm_to_vmem [thread:$0]  %s2, 512, %s46, [#allocation6], 128, 128, 8
    $region13: #{tpu_custom_call.1} parent=1 // pred_fallthru
      _
    // Predicated region
    $region14: #{tpu_custom_call.1} parent=1 // pred_check
      _
    $region15: #{tpu_custom_call.1} parent=1 // pred_check_branch
      %53 = sbr.rel (0) target = $region17
    $region16: #{tpu_custom_call.1} parent=1 // pred_region
      _
    $region17: #{tpu_custom_call.1} parent=1 // pred_fallthru
      _
    // Predicated region
    $region18: #{tpu_custom_call.1} parent=1 // pred_check
      _
    $region19: #{tpu_custom_call.1} parent=1 // pred_check_branch
      %55 = sbr.rel (0) target = $region21
    $region20: #{tpu_custom_call.1} parent=1 // pred_region
      %s57 = ssub.s32 512, 512
      %58 = vsyncadd [#allocation9], %s57
      %s59 = sshll.u32 [#allocation8], 4
      %s60 = int_to_ptr.vmem [resolvable:$true] %s59
      %65 = dma.hbm_to_vmem [thread:$0]  %s4, 512, %s60, [#allocation9], 128, 128, 8
    $region21: #{tpu_custom_call.1} parent=1 // pred_fallthru
      _
    // Predicated region
    $region22: #{tpu_custom_call.1} parent=1 // pred_check
      _
    $region23: #{tpu_custom_call.1} parent=1 // pred_check_branch
      %67 = sbr.rel (0) target = $region25
    $region24: #{tpu_custom_call.1} parent=1 // pred_region
      _
    $region25: #{tpu_custom_call.1} parent=1 // pred_fallthru
      _
    // Predicated region
    $region26: #{tpu_custom_call.1} parent=1 // pred_check
      _
    $region27: #{tpu_custom_call.1} parent=1 // pred_check_branch
      %69 = sbr.rel (0) target = $region29
    $region28: #{tpu_custom_call.1} parent=1 // pred_region
      _
    $region29: #{tpu_custom_call.1} parent=1 // pred_fallthru
      _
    // Predicated region
    $region30: #{tpu_custom_call.1} parent=1 // pred_check
      _
    $region31: #{tpu_custom_call.1} parent=1 // pred_check_branch
      %71 = sbr.rel (0) target = $region33
    $region32: #{tpu_custom_call.1} parent=1 // pred_region
      %s73 = ssub.s32 512, 512
      %74 = vsyncadd [#allocation9], %s73
      %s75 = sshll.u32 [#allocation10], 4
      %s76 = int_to_ptr.vmem [resolvable:$true] %s75
      %81 = dma.hbm_to_vmem [thread:$0]  %s7, 512, %s76, [#allocation9], 128, 128, 8
    $region33: #{tpu_custom_call.1} parent=1 // pred_fallthru
      _
    // Predicated region
    $region34: #{tpu_custom_call.1} parent=1 // pred_check
      _
    $region35: #{tpu_custom_call.1} parent=1 // pred_check_branch
      %83 = sbr.rel (0) target = $region37
    $region36: #{tpu_custom_call.1} parent=1 // pred_region
      _
    $region37: #{tpu_custom_call.1} parent=1 // pred_fallthru
      _
    // Predicated region
    $region38: #{tpu_custom_call.1} parent=1 // pred_check
      _
    $region39: #{tpu_custom_call.1} parent=1 // pred_check_branch
      %85 = sbr.rel (0) target = $region41
    $region40: #{tpu_custom_call.1} parent=1 // pred_region
      %86 = dma.done [#allocation3], 128
    $region41: #{tpu_custom_call.1} parent=1 // pred_fallthru
      _
    // Predicated region
    $region42: #{tpu_custom_call.1} parent=1 // pred_check
      _
    $region43: #{tpu_custom_call.1} parent=1 // pred_check_branch
      %88 = sbr.rel (0) target = $region45
    $region44: #{tpu_custom_call.1} parent=1 // pred_region
      %89 = dma.done [#allocation6], 1024
    $region45: #{tpu_custom_call.1} parent=1 // pred_fallthru
      _
    // Predicated region
    $region46: #{tpu_custom_call.1} parent=1 // pred_check
      _
    $region47: #{tpu_custom_call.1} parent=1 // pred_check_branch
      %91 = sbr.rel (0) target = $region49
    $region48: #{tpu_custom_call.1} parent=1 // pred_region
      %92 = dma.done [#allocation6], 512
    $region49: #{tpu_custom_call.1} parent=1 // pred_fallthru
      _
    // Predicated region
    $region50: #{tpu_custom_call.1} parent=1 // pred_check
      _
    $region51: #{tpu_custom_call.1} parent=1 // pred_check_branch
      %94 = sbr.rel (0) target = $region53
    $region52: #{tpu_custom_call.1} parent=1 // pred_region
      %95 = dma.done [#allocation9], 512
    $region53: #{tpu_custom_call.1} parent=1 // pred_fallthru
      _
    // Predicated region
    $region54: #{tpu_custom_call.1} parent=1 // pred_check
      _
    $region55: #{tpu_custom_call.1} parent=1 // pred_check_branch
      %97 = sbr.rel (0) target = $region57
    $region56: #{tpu_custom_call.1} parent=1 // pred_region
      %98 = dma.done [#allocation9], 512
    $region57: #{tpu_custom_call.1} parent=1 // pred_fallthru
      _
    %v99 = vld [vmem:[#allocation2] sm:$0xff]
    %v100 = vld [vmem:[#allocation5] sm:$0xff]
    %v101 = vld [vmem:[#allocation5 + $0x8] sm:$0xff]
    %v102 = vld [vmem:[#allocation5 + $0x10] sm:$0xff]
    %v103 = vld [vmem:[#allocation5 + $0x18] sm:$0xff]
    %v104 = vld [vmem:[#allocation5 + $0x20] sm:$0xff]
    %v105 = vld [vmem:[#allocation5 + $0x28] sm:$0xff]
    %v106 = vld [vmem:[#allocation5 + $0x30] sm:$0xff]
    %v107 = vld [vmem:[#allocation5 + $0x38] sm:$0xff]
    %v108 = vld [vmem:[#allocation7] sm:$0xff]
    %v109 = vld [vmem:[#allocation7 + $0x8] sm:$0xff]
    %v110 = vld [vmem:[#allocation7 + $0x10] sm:$0xff]
    %v111 = vld [vmem:[#allocation7 + $0x18] sm:$0xff]
    %v112 = vld [vmem:[%s3] sm:$0x1]
    %v113 = vld [vmem:[%s5] sm:$0x3]
    %v114 = vld [vmem:[%s6] sm:$0x1]
    %v115 = vld [vmem:[#allocation8] sm:$0xff]
    %v116 = vld [vmem:[#allocation8 + $0x8] sm:$0xff]
    %v117 = vld [vmem:[#allocation8 + $0x10] sm:$0xff]
    %v118 = vld [vmem:[#allocation8 + $0x18] sm:$0xff]
    %vm119 = vcmask 261120
    %v121 = vsel %vm119, %v100, 0
    %v124 = vsel %vm119, %v101, 0
    %v127 = vsel %vm119, %v102, 0
    %v130 = vsel %vm119, %v103, 0
    %v133 = vsel %vm119, %v104, 0
    %v136 = vsel %vm119, %v105, 0
    %v139 = vsel %vm119, %v106, 0
    %v142 = vsel %vm119, %v107, 0
    %144 = vmatprep.subr.mxu0 0.0
    %145 = vmatpush1.msra.mxu0 %v115
    %146 = vmatprep.subr.mxu0 0.0
    %147 = vmatpush1.msra.mxu0 %v116
    %148 = vmatprep.subr.mxu0 0.0
    %149 = vmatpush1.msra.mxu0 %v117
    %150 = vmatprep.subr.mxu0 0.0
    %151 = vmatpush1.msra.mxu0 %v118
    %152 = vmatprep.subr.mxu0 0.0
    %153 = vmatpush1.msra.mxu0 0.0
    %154 = vmatprep.subr.mxu0 0.0
    %155 = vmatpush1.msra.mxu0 0.0
    %156 = vmatprep.subr.mxu0 0.0
    %157 = vmatpush1.msra.mxu0 0.0
    %158 = vmatprep.subr.mxu0 0.0
    %159 = vmatpush1.msra.mxu0 0.0
    %160 = vmatprep.subr.mxu0 0.0
    %161 = vmatpush1.msra.mxu0 0.0
    %162 = vmatprep.subr.mxu0 0.0
    %163 = vmatpush1.msra.mxu0 0.0
    %164 = vmatprep.subr.mxu0 0.0
    %165 = vmatpush1.msra.mxu0 0.0
    %166 = vmatprep.subr.mxu0 0.0
    %167 = vmatpush1.msra.mxu0 0.0
    %168 = vmatprep.subr.mxu0 0.0
    %169 = vmatpush1.msra.mxu0 0.0
    %170 = vmatprep.subr.mxu0 0.0
    %171 = vmatpush1.msra.mxu0 0.0
    %172 = vmatprep.subr.mxu0 0.0
    %173 = vmatpush1.msra.mxu0 0.0
    %174 = vmatprep.subr.mxu0 0.0
    %175 = vmatpush1.msra.mxu0 0.0
    %176 = vmatprep.subr.mxu0 0.0
    %177 = vmatpush1.msra.mxu0 0.0
    %178 = vmatprep.subr.mxu0 0.0
    %179 = vmatpush1.msra.mxu0 0.0
    %180 = vmatprep.subr.mxu0 0.0
    %181 = vmatpush1.msra.mxu0 0.0
    %182 = vmatprep.subr.mxu0 0.0
    %183 = vmatpush1.msra.mxu0 0.0
    %184 = vmatprep.subr.mxu0 0.0
    %185 = vmatpush1.msra.mxu0 0.0
    %186 = vmatprep.subr.mxu0 0.0
    %187 = vmatpush1.msra.mxu0 0.0
    %188 = vmatprep.subr.mxu0 0.0
    %189 = vmatpush1.msra.mxu0 0.0
    %190 = vmatprep.subr.mxu0 0.0
    %191 = vmatpush1.msra.mxu0 0.0
    %192 = vmatprep.subr.mxu0 0.0
    %193 = vmatpush1.msra.mxu0 0.0
    %194 = vmatprep.subr.mxu0 0.0
    %195 = vmatpush1.msra.mxu0 0.0
    %196 = vmatprep.subr.mxu0 0.0
    %197 = vmatpush1.msra.mxu0 0.0
    %198 = vmatprep.subr.mxu0 0.0
    %199 = vmatpush1.msra.mxu0 0.0
    %200 = vmatprep.subr.mxu0 0.0
    %201 = vmatpush1.msra.mxu0 0.0
    %202 = vmatprep.subr.mxu0 0.0
    %203 = vmatpush1.msra.mxu0 0.0
    %204 = vmatprep.subr.mxu0 0.0
    %205 = vmatpush1.msra.mxu0 0.0
    %206 = vmatprep.subr.mxu0 0.0
    %207 = vmatpush1.msra.mxu0 0.0
    %208 = vmatprep.mubr.f32.mxu0 0.0
    %209 = vmatmul.mubr.f32.gmra.mrb[0].mxu0 %v121
    %v210 = vpop.f32.mrb[0].mxu0
    %v211 = vadd.f32 0.0, %v210
    %v212 = vpop.f32.mrb[0].mxu0
    %213 = vmatprep.mubr.f32.mxu0 0.0
    %214 = vmatmul.mubr.f32.gmra.mrb[0].mxu0 %v124
    %v215 = vpop.f32.mrb[0].mxu0
    %v216 = vadd.f32 0.0, %v215
    %v217 = vpop.f32.mrb[0].mxu0
    %218 = vmatprep.mubr.f32.mxu0 0.0
    %219 = vmatmul.mubr.f32.gmra.mrb[0].mxu0 %v127
    %v220 = vpop.f32.mrb[0].mxu0
    %v221 = vadd.f32 0.0, %v220
    %v222 = vpop.f32.mrb[0].mxu0
    %223 = vmatprep.mubr.f32.mxu0 0.0
    %224 = vmatmul.mubr.f32.gmra.mrb[0].mxu0 %v130
    %v225 = vpop.f32.mrb[0].mxu0
    %v226 = vadd.f32 0.0, %v225
    %v227 = vpop.f32.mrb[0].mxu0
    %228 = vmatprep.mubr.f32.mxu0 0.0
    %229 = vmatmul.mubr.f32.gmra.mrb[0].mxu0 %v133
    %v230 = vpop.f32.mrb[0].mxu0
    %v231 = vadd.f32 0.0, %v230
    %v232 = vpop.f32.mrb[0].mxu0
    %233 = vmatprep.mubr.f32.mxu0 0.0
    %234 = vmatmul.mubr.f32.gmra.mrb[0].mxu0 %v136
    %v235 = vpop.f32.mrb[0].mxu0
    %v236 = vadd.f32 0.0, %v235
    %v237 = vpop.f32.mrb[0].mxu0
    %238 = vmatprep.mubr.f32.mxu0 0.0
    %239 = vmatmul.mubr.f32.gmra.mrb[0].mxu0 %v139
    %v240 = vpop.f32.mrb[0].mxu0
    %v241 = vadd.f32 0.0, %v240
    %v242 = vpop.f32.mrb[0].mxu0
    %243 = vmatprep.mubr.f32.mxu0 0.0
    %244 = vmatmul.mubr.f32.gmra.mrb[0].mxu0 %v142
    %v245 = vpop.f32.mrb[0].mxu0
    %v246 = vadd.f32 0.0, %v245
    %v247 = vpop.f32.mrb[0].mxu0
    %248 = vdwg.mxu0
    %v250 = vlaneseq
    %v251 = vshrl.u32 %v250, 7
    %v252 = vsub.s32 0, %v251
    %v253 = vrot.slane %v112, %v252
    %v256 = vsel %vm119, %v99, 0
    %258 = vmatprep.subr.mxu0 0.0
    %259 = vmatpush1.msra.mxu0 %v108
    %260 = vmatprep.subr.mxu0 0.0
    %261 = vmatpush1.msra.mxu0 %v109
    %262 = vmatprep.subr.mxu0 0.0
    %263 = vmatpush1.msra.mxu0 %v110
    %264 = vmatprep.subr.mxu0 0.0
    %265 = vmatpush1.msra.mxu0 %v111
    %266 = vmatprep.subr.mxu0 0.0
    %267 = vmatpush1.msra.mxu0 0.0
    %268 = vmatprep.subr.mxu0 0.0
    %269 = vmatpush1.msra.mxu0 0.0
    %270 = vmatprep.subr.mxu0 0.0
    %271 = vmatpush1.msra.mxu0 0.0
    %272 = vmatprep.subr.mxu0 0.0
    %273 = vmatpush1.msra.mxu0 0.0
    %274 = vmatprep.subr.mxu0 0.0
    %275 = vmatpush1.msra.mxu0 0.0
    %276 = vmatprep.subr.mxu0 0.0
    %277 = vmatpush1.msra.mxu0 0.0
    %278 = vmatprep.subr.mxu0 0.0
    %279 = vmatpush1.msra.mxu0 0.0
    %280 = vmatprep.subr.mxu0 0.0
    %281 = vmatpush1.msra.mxu0 0.0
    %282 = vmatprep.subr.mxu0 0.0
    %283 = vmatpush1.msra.mxu0 0.0
    %284 = vmatprep.subr.mxu0 0.0
    %285 = vmatpush1.msra.mxu0 0.0
    %286 = vmatprep.subr.mxu0 0.0
    %287 = vmatpush1.msra.mxu0 0.0
    %288 = vmatprep.subr.mxu0 0.0
    %289 = vmatpush1.msra.mxu0 0.0
    %290 = vmatprep.subr.mxu0 0.0
    %291 = vmatpush1.msra.mxu0 0.0
    %292 = vmatprep.subr.mxu0 0.0
    %293 = vmatpush1.msra.mxu0 0.0
    %294 = vmatprep.subr.mxu0 0.0
    %295 = vmatpush1.msra.mxu0 0.0
    %296 = vmatprep.subr.mxu0 0.0
    %297 = vmatpush1.msra.mxu0 0.0
    %298 = vmatprep.subr.mxu0 0.0
    %299 = vmatpush1.msra.mxu0 0.0
    %300 = vmatprep.subr.mxu0 0.0
    %301 = vmatpush1.msra.mxu0 0.0
    %302 = vmatprep.subr.mxu0 0.0
    %303 = vmatpush1.msra.mxu0 0.0
    %304 = vmatprep.subr.mxu0 0.0
    %305 = vmatpush1.msra.mxu0 0.0
    %306 = vmatprep.subr.mxu0 0.0
    %307 = vmatpush1.msra.mxu0 0.0
    %308 = vmatprep.subr.mxu0 0.0
    %309 = vmatpush1.msra.mxu0 0.0
    %310 = vmatprep.subr.mxu0 0.0
    %311 = vmatpush1.msra.mxu0 0.0
    %312 = vmatprep.subr.mxu0 0.0
    %313 = vmatpush1.msra.mxu0 0.0
    %314 = vmatprep.subr.mxu0 0.0
    %315 = vmatpush1.msra.mxu0 0.0
    %316 = vmatprep.subr.mxu0 0.0
    %317 = vmatpush1.msra.mxu0 0.0
    %318 = vmatprep.subr.mxu0 0.0
    %319 = vmatpush1.msra.mxu0 0.0
    %320 = vmatprep.subr.mxu0 0.0
    %321 = vmatpush1.msra.mxu0 0.0
    %322 = vmatprep.mubr.f32.mxu0 0.0
    %323 = vmatmul.mubr.f32.gmra.mrb[0].mxu0 %v256
    %v324 = vpop.f32.mrb[0].mxu0
    %v325 = vadd.f32 %v253, %v324
    %v326 = vpop.f32.mrb[0].mxu0
    %327 = vdwg.mxu0
    %v329 = vcombine.high %v325, %v325
    %v331 = vunpack.c.l.s4 1966171168
    %v332 = vunpack.c.0.s8 %v331
    %v333 = vlaneseq
    %v334 = vshrl.u32 %v333, 7
    %v335 = vsub.s32 %v332, %v334
    %v336 = vrot.slane %v325, %v335
    %v338 = vunpack.c.l.s4 1966171168
    %v339 = vunpack.c.0.s8 %v338
    %v340 = vlaneseq
    %v341 = vshrl.u32 %v340, 7
    %v342 = vsub.s32 %v339, %v341
    %v343 = vrot.slane %v329, %v342
    %v344 = vcombine.high %v336, %v336
    %v345 = vcombine.high %v343, %v343
    %v347 = vunpack.c.l.s4 1966171168
    %v348 = vunpack.c.0.s8 %v347
    %v349 = vlaneseq
    %v350 = vshrl.u32 %v349, 7
    %v351 = vsub.s32 %v348, %v350
    %v352 = vrot.slane %v336, %v351
    %v354 = vunpack.c.l.s4 1966171168
    %v355 = vunpack.c.0.s8 %v354
    %v356 = vlaneseq
    %v357 = vshrl.u32 %v356, 7
    %v358 = vsub.s32 %v355, %v357
    %v359 = vrot.slane %v343, %v358
    %v361 = vunpack.c.l.s4 1966171168
    %v362 = vunpack.c.0.s8 %v361
    %v363 = vlaneseq
    %v364 = vshrl.u32 %v363, 7
    %v365 = vsub.s32 %v362, %v364
    %v366 = vrot.slane %v344, %v365
    %v368 = vunpack.c.l.s4 1966171168
    %v369 = vunpack.c.0.s8 %v368
    %v370 = vlaneseq
    %v371 = vshrl.u32 %v370, 7
    %v372 = vsub.s32 %v369, %v371
    %v373 = vrot.slane %v345, %v372
    %v374 = vcombine.high %v352, %v352
    %v375 = vcombine.high %v359, %v359
    %v376 = vcombine.high %v366, %v366
    %v377 = vcombine.high %v373, %v373
    %v378 = vlaneseq
    %v379 = vshrl.u32 %v378, 7
    %v380 = vsub.s32 0, %v379
    %v381 = vrot.slane %v352, %v380
    %v382 = vlaneseq
    %v383 = vshrl.u32 %v382, 7
    %v384 = vsub.s32 0, %v383
    %v385 = vrot.slane %v366, %v384
    %v386 = vlaneseq
    %v387 = vshrl.u32 %v386, 7
    %v388 = vsub.s32 0, %v387
    %v389 = vrot.slane %v374, %v388
    %v390 = vlaneseq
    %v391 = vshrl.u32 %v390, 7
    %v392 = vsub.s32 0, %v391
    %v393 = vrot.slane %v376, %v392
    %v394 = vlaneseq
    %v395 = vshrl.u32 %v394, 7
    %v396 = vsub.s32 0, %v395
    %v397 = vrot.slane %v359, %v396
    %v398 = vlaneseq
    %v399 = vshrl.u32 %v398, 7
    %v400 = vsub.s32 0, %v399
    %v401 = vrot.slane %v373, %v400
    %v402 = vlaneseq
    %v403 = vshrl.u32 %v402, 7
    %v404 = vsub.s32 0, %v403
    %v405 = vrot.slane %v375, %v404
    %v406 = vlaneseq
    %v407 = vshrl.u32 %v406, 7
    %v408 = vsub.s32 0, %v407
    %v409 = vrot.slane %v377, %v408
    %v418 = vadd.f32 %v381, %v211
    %v419 = vadd.f32 %v385, %v216
    %v420 = vadd.f32 %v389, %v221
    %v421 = vadd.f32 %v393, %v226
    %v422 = vadd.f32 %v397, %v231
    %v423 = vadd.f32 %v401, %v236
    %v424 = vadd.f32 %v405, %v241
    %v425 = vadd.f32 %v409, %v246
    %v426 = vtanh.pop %v418
    %v427 = vtanh.pop %v419
    %v428 = vtanh.pop %v420
    %v429 = vtanh.pop %v421
    %v430 = vtanh.pop %v422
    %v431 = vtanh.pop %v423
    %v432 = vtanh.pop %v424
    %v433 = vtanh.pop %v425
    %v434 = vlaneseq
    %v435 = vshrl.u32 %v434, 7
    %v436 = vsub.s32 0, %v435
    %v437 = vrot.slane %v113, %v436
    %v438 = vmul.f32 %v426, %v437
    %v439 = vmul.f32 %v427, %v437
    %v440 = vmul.f32 %v428, %v437
    %v441 = vmul.f32 %v429, %v437
    %v442 = vmul.f32 %v430, %v437
    %v443 = vmul.f32 %v431, %v437
    %v444 = vmul.f32 %v432, %v437
    %v445 = vmul.f32 %v433, %v437
    %vm446 = vcmask 130048
    %v447 = vsel %vm446, %v438, 0.0
    %448 = vadd.xlane.f32.xlu0 %v447
    %v449 = vpop.xlane.xlu0 %448
    %v450 = vsel %vm446, %v439, 0.0
    %451 = vadd.xlane.f32.xlu0 %v450
    %v452 = vpop.xlane.xlu0 %451
    %v453 = vsel %vm446, %v440, 0.0
    %454 = vadd.xlane.f32.xlu0 %v453
    %v455 = vpop.xlane.xlu0 %454
    %v456 = vsel %vm446, %v441, 0.0
    %457 = vadd.xlane.f32.xlu0 %v456
    %v458 = vpop.xlane.xlu0 %457
    %v459 = vsel %vm446, %v442, 0.0
    %460 = vadd.xlane.f32.xlu0 %v459
    %v461 = vpop.xlane.xlu0 %460
    %v462 = vsel %vm446, %v443, 0.0
    %463 = vadd.xlane.f32.xlu0 %v462
    %v464 = vpop.xlane.xlu0 %463
    %v465 = vsel %vm446, %v444, 0.0
    %466 = vadd.xlane.f32.xlu0 %v465
    %v467 = vpop.xlane.xlu0 %466
    %v468 = vsel %vm446, %v445, 0.0
    %469 = vadd.xlane.f32.xlu0 %v468
    %v470 = vpop.xlane.xlu0 %469
    %v472 = vlaneseq
    %v473 = vshrl.u32 %v472, 7
    %v474 = vsub.s32 0, %v473
    %v475 = vrot.slane %v114, %v474
    %476 = vset.pattern.permute.xlu0 0
    %477 = vperm.xlu0 %476, %v475
    %v478 = vpop.permute.xlu0 %477
    %v480 = vadd.f32 %v449, %v478
    %v481 = vadd.f32 %v452, %v478
    %v482 = vadd.f32 %v455, %v478
    %v483 = vadd.f32 %v458, %v478
    %v484 = vadd.f32 %v461, %v478
    %v485 = vadd.f32 %v464, %v478
    %v486 = vadd.f32 %v467, %v478
    %v487 = vadd.f32 %v470, %v478
    %v496 = vlaneseq
    %v497 = vand.u32 %v496, 127
    %v498 = vlaneseq
    %v499 = vshrl.u32 %v498, 7
    %v500 = vsub.s32 %v497, %v499
    %v501 = vrot.slane %v480, %v500
    %v502 = vlaneseq
    %v503 = vshrl.u32 %v502, 7
    %v504 = vsub.s32 %v497, %v503
    %v505 = vrot.slane %v481, %v504
    %v506 = vlaneseq
    %v507 = vshrl.u32 %v506, 7
    %v508 = vsub.s32 %v497, %v507
    %v509 = vrot.slane %v482, %v508
    %v510 = vlaneseq
    %v511 = vshrl.u32 %v510, 7
    %v512 = vsub.s32 %v497, %v511
    %v513 = vrot.slane %v483, %v512
    %v514 = vlaneseq
    %v515 = vshrl.u32 %v514, 7
    %v516 = vsub.s32 %v497, %v515
    %v517 = vrot.slane %v484, %v516
    %v518 = vlaneseq
    %v519 = vshrl.u32 %v518, 7
    %v520 = vsub.s32 %v497, %v519
    %v521 = vrot.slane %v485, %v520
    %v522 = vlaneseq
    %v523 = vshrl.u32 %v522, 7
    %v524 = vsub.s32 %v497, %v523
    %v525 = vrot.slane %v486, %v524
    %v526 = vlaneseq
    %v527 = vshrl.u32 %v526, 7
    %v528 = vsub.s32 %v497, %v527
    %v529 = vrot.slane %v487, %v528
    %vm530 = vcmask 1041409
    %v531 = vsel %vm530, %v505, %v501
    %vm532 = vcmask 1042434
    %v533 = vsel %vm532, %v509, %v531
    %vm534 = vcmask 1043459
    %v535 = vsel %vm534, %v513, %v533
    %vm536 = vcmask 1044484
    %v537 = vsel %vm536, %v517, %v535
    %vm538 = vcmask 1045509
    %v539 = vsel %vm538, %v521, %v537
    %vm540 = vcmask 1046534
    %v541 = vsel %vm540, %v525, %v539
    %vm542 = vcmask 1047559
    %v543 = vsel %vm542, %v529, %v541
    %vm545 = vcmask 64512
    %v546 = vsel %vm545, %v543, -inf
    %547 = vmax.xlane.f32.xlu0 %v546
    %v548 = vpop.xlane.xlu0 %547
    %v550 = vlaneseq
    %v551 = vshrl.u32 %v550, 7
    %v552 = vsub.s32 0, %v551
    %v553 = vrot.slane %v548, %v552
    %v554 = vlaneseq
    %v555 = vshrl.u32 %v554, 7
    %v556 = vsub.s32 1, %v555
    %v557 = vrot.slane %v548, %v556
    %v558 = vlaneseq
    %v559 = vshrl.u32 %v558, 7
    %v560 = vsub.s32 2, %v559
    %v561 = vrot.slane %v548, %v560
    %v562 = vlaneseq
    %v563 = vshrl.u32 %v562, 7
    %v564 = vsub.s32 3, %v563
    %v565 = vrot.slane %v548, %v564
    %v566 = vlaneseq
    %v567 = vshrl.u32 %v566, 7
    %v568 = vsub.s32 4, %v567
    %v569 = vrot.slane %v548, %v568
    %v570 = vlaneseq
    %v571 = vshrl.u32 %v570, 7
    %v572 = vsub.s32 5, %v571
    %v573 = vrot.slane %v548, %v572
    %v574 = vlaneseq
    %v575 = vshrl.u32 %v574, 7
    %v576 = vsub.s32 6, %v575
    %v577 = vrot.slane %v548, %v576
    %v578 = vlaneseq
    %v579 = vshrl.u32 %v578, 7
    %v580 = vsub.s32 7, %v579
    %v581 = vrot.slane %v548, %v580
    %v590 = vsub.f32 %v480, %v553
    %v591 = vsub.f32 %v481, %v557
    %v592 = vsub.f32 %v482, %v561
    %v593 = vsub.f32 %v483, %v565
    %v594 = vsub.f32 %v484, %v569
    %v595 = vsub.f32 %v485, %v573
    %v596 = vsub.f32 %v486, %v577
    %v597 = vsub.f32 %v487, %v581
    %v598 = vmul.f32 %v590, 1.442695
    %v599 = vpow.pop %v598
    %v600 = vmul.f32 %v591, 1.442695
    %v601 = vpow.pop %v600
    %v602 = vmul.f32 %v592, 1.442695
    %v603 = vpow.pop %v602
    %v604 = vmul.f32 %v593, 1.442695
    %v605 = vpow.pop %v604
    %v606 = vmul.f32 %v594, 1.442695
    %v607 = vpow.pop %v606
    %v608 = vmul.f32 %v595, 1.442695
    %v609 = vpow.pop %v608
    %v610 = vmul.f32 %v596, 1.442695
    %v611 = vpow.pop %v610
    %v612 = vmul.f32 %v597, 1.442695
    %v613 = vpow.pop %v612
    %622 = vset.pattern.permute.xlu0 0
    %623 = vperm.xlu0 %622, %v599
    %v624 = vpop.permute.xlu0 %623
    %625 = vset.pattern.permute.xlu0 0
    %626 = vperm.xlu0 %625, %v601
    %v627 = vpop.permute.xlu0 %626
    %628 = vset.pattern.permute.xlu0 0
    %629 = vperm.xlu0 %628, %v603
    %v630 = vpop.permute.xlu0 %629
    %631 = vset.pattern.permute.xlu0 0
    %632 = vperm.xlu0 %631, %v605
    %v633 = vpop.permute.xlu0 %632
    %634 = vset.pattern.permute.xlu0 0
    %635 = vperm.xlu0 %634, %v607
    %v636 = vpop.permute.xlu0 %635
    %637 = vset.pattern.permute.xlu0 0
    %638 = vperm.xlu0 %637, %v609
    %v639 = vpop.permute.xlu0 %638
    %640 = vset.pattern.permute.xlu0 0
    %641 = vperm.xlu0 %640, %v611
    %v642 = vpop.permute.xlu0 %641
    %643 = vset.pattern.permute.xlu0 0
    %644 = vperm.xlu0 %643, %v613
    %v645 = vpop.permute.xlu0 %644
    %v646 = vlaneseq
    %v647 = vshrl.u32 %v646, 7
    %v648 = vsub.s32 %v497, %v647
    %v649 = vrot.slane %v624, %v648
    %v650 = vlaneseq
    %v651 = vshrl.u32 %v650, 7
    %v652 = vsub.s32 %v497, %v651
    %v653 = vrot.slane %v627, %v652
    %v654 = vlaneseq
    %v655 = vshrl.u32 %v654, 7
    %v656 = vsub.s32 %v497, %v655
    %v657 = vrot.slane %v630, %v656
    %v658 = vlaneseq
    %v659 = vshrl.u32 %v658, 7
    %v660 = vsub.s32 %v497, %v659
    %v661 = vrot.slane %v633, %v660
    %v662 = vlaneseq
    %v663 = vshrl.u32 %v662, 7
    %v664 = vsub.s32 %v497, %v663
    %v665 = vrot.slane %v636, %v664
    %v666 = vlaneseq
    %v667 = vshrl.u32 %v666, 7
    %v668 = vsub.s32 %v497, %v667
    %v669 = vrot.slane %v639, %v668
    %v670 = vlaneseq
    %v671 = vshrl.u32 %v670, 7
    %v672 = vsub.s32 %v497, %v671
    %v673 = vrot.slane %v642, %v672
    %v674 = vlaneseq
    %v675 = vshrl.u32 %v674, 7
    %v676 = vsub.s32 %v497, %v675
    %v677 = vrot.slane %v645, %v676
    %v678 = vsel %vm530, %v653, %v649
    %v679 = vsel %vm532, %v657, %v678
    %v680 = vsel %vm534, %v661, %v679
    %v681 = vsel %vm536, %v665, %v680
    %v682 = vsel %vm538, %v669, %v681
    %v683 = vsel %vm540, %v673, %v682
    %v684 = vsel %vm542, %v677, %v683
    %v686 = vsel %vm545, %v684, 0.0
    %687 = vadd.xlane.f32.xlu0 %v686
    %v688 = vpop.xlane.xlu0 %687
    %v689 = vrcp.pop %v688
    %v691 = vlaneseq
    %v692 = vshrl.u32 %v691, 7
    %v693 = vsub.s32 0, %v692
    %v694 = vrot.slane %v689, %v693
    %v695 = vlaneseq
    %v696 = vshrl.u32 %v695, 7
    %v697 = vsub.s32 1, %v696
    %v698 = vrot.slane %v689, %v697
    %v699 = vlaneseq
    %v700 = vshrl.u32 %v699, 7
    %v701 = vsub.s32 2, %v700
    %v702 = vrot.slane %v689, %v701
    %v703 = vlaneseq
    %v704 = vshrl.u32 %v703, 7
    %v705 = vsub.s32 3, %v704
    %v706 = vrot.slane %v689, %v705
    %v707 = vlaneseq
    %v708 = vshrl.u32 %v707, 7
    %v709 = vsub.s32 4, %v708
    %v710 = vrot.slane %v689, %v709
    %v711 = vlaneseq
    %v712 = vshrl.u32 %v711, 7
    %v713 = vsub.s32 5, %v712
    %v714 = vrot.slane %v689, %v713
    %v715 = vlaneseq
    %v716 = vshrl.u32 %v715, 7
    %v717 = vsub.s32 6, %v716
    %v718 = vrot.slane %v689, %v717
    %v719 = vlaneseq
    %v720 = vshrl.u32 %v719, 7
    %v721 = vsub.s32 7, %v720
    %v722 = vrot.slane %v689, %v721
    %v731 = vmul.f32 %v599, %v694
    %v732 = vmul.f32 %v601, %v698
    %v733 = vmul.f32 %v603, %v702
    %v734 = vmul.f32 %v605, %v706
    %v735 = vmul.f32 %v607, %v710
    %v736 = vmul.f32 %v609, %v714
    %v737 = vmul.f32 %v611, %v718
    %v738 = vmul.f32 %v613, %v722
    %740 = vset.pattern.permute.xlu0 0
    %741 = vperm.xlu0 %740, %v731
    %v742 = vpop.permute.xlu0 %741
    %745 = vset.pattern.permute.xlu0 0
    %746 = vperm.xlu0 %745, %v732
    %v747 = vpop.permute.xlu0 %746
    %750 = vset.pattern.permute.xlu0 0
    %751 = vperm.xlu0 %750, %v733
    %v752 = vpop.permute.xlu0 %751
    %755 = vset.pattern.permute.xlu0 0
    %756 = vperm.xlu0 %755, %v734
    %v757 = vpop.permute.xlu0 %756
    %760 = vset.pattern.permute.xlu0 0
    %761 = vperm.xlu0 %760, %v735
    %v762 = vpop.permute.xlu0 %761
    %765 = vset.pattern.permute.xlu0 0
    %766 = vperm.xlu0 %765, %v736
    %v767 = vpop.permute.xlu0 %766
    %770 = vset.pattern.permute.xlu0 0
    %771 = vperm.xlu0 %770, %v737
    %v772 = vpop.permute.xlu0 %771
    %775 = vset.pattern.permute.xlu0 0
    %776 = vperm.xlu0 %775, %v738
    %v777 = vpop.permute.xlu0 %776
    %v779 = vmul.f32 %v742, %v100
    %v780 = vmul.f32 %v747, %v101
    %v781 = vmul.f32 %v752, %v102
    %v782 = vmul.f32 %v757, %v103
    %v783 = vmul.f32 %v762, %v104
    %v784 = vmul.f32 %v767, %v105
    %v785 = vmul.f32 %v772, %v106
    %v786 = vmul.f32 %v777, %v107
    %v787 = vsel %vm119, %v779, 0.0
    %v788 = vrot.slane %v787, 4
    %v789 = vadd.f32 %v787, %v788
    %v790 = vrot.slane %v789, 2
    %v791 = vadd.f32 %v789, %v790
    %v792 = vrot.slane %v791, 1
    %v793 = vadd.f32 %v791, %v792
    %v794 = vsel %vm119, %v780, 0.0
    %v795 = vrot.slane %v794, 4
    %v796 = vadd.f32 %v794, %v795
    %v797 = vrot.slane %v796, 2
    %v798 = vadd.f32 %v796, %v797
    %v799 = vrot.slane %v798, 1
    %v800 = vadd.f32 %v798, %v799
    %v801 = vsel %vm119, %v781, 0.0
    %v802 = vrot.slane %v801, 4
    %v803 = vadd.f32 %v801, %v802
    %v804 = vrot.slane %v803, 2
    %v805 = vadd.f32 %v803, %v804
    %v806 = vrot.slane %v805, 1
    %v807 = vadd.f32 %v805, %v806
    %v808 = vsel %vm119, %v782, 0.0
    %v809 = vrot.slane %v808, 4
    %v810 = vadd.f32 %v808, %v809
    %v811 = vrot.slane %v810, 2
    %v812 = vadd.f32 %v810, %v811
    %v813 = vrot.slane %v812, 1
    %v814 = vadd.f32 %v812, %v813
    %v815 = vsel %vm119, %v783, 0.0
    %v816 = vrot.slane %v815, 4
    %v817 = vadd.f32 %v815, %v816
    %v818 = vrot.slane %v817, 2
    %v819 = vadd.f32 %v817, %v818
    %v820 = vrot.slane %v819, 1
    %v821 = vadd.f32 %v819, %v820
    %v822 = vsel %vm119, %v784, 0.0
    %v823 = vrot.slane %v822, 4
    %v824 = vadd.f32 %v822, %v823
    %v825 = vrot.slane %v824, 2
    %v826 = vadd.f32 %v824, %v825
    %v827 = vrot.slane %v826, 1
    %v828 = vadd.f32 %v826, %v827
    %v829 = vsel %vm119, %v785, 0.0
    %v830 = vrot.slane %v829, 4
    %v831 = vadd.f32 %v829, %v830
    %v832 = vrot.slane %v831, 2
    %v833 = vadd.f32 %v831, %v832
    %v834 = vrot.slane %v833, 1
    %v835 = vadd.f32 %v833, %v834
    %v836 = vsel %vm119, %v786, 0.0
    %v837 = vrot.slane %v836, 4
    %v838 = vadd.f32 %v836, %v837
    %v839 = vrot.slane %v838, 2
    %v840 = vadd.f32 %v838, %v839
    %v841 = vrot.slane %v840, 1
    %v842 = vadd.f32 %v840, %v841
    %v851 = vsel %vm530, %v800, %v793
    %v852 = vsel %vm532, %v807, %v851
    %v853 = vsel %vm534, %v814, %v852
    %v854 = vsel %vm536, %v821, %v853
    %v855 = vsel %vm538, %v828, %v854
    %v856 = vsel %vm540, %v835, %v855
    %v857 = vsel %vm542, %v842, %v856
    %v859 = vadd.f32 %v99, %v857
    %864 = vrot.lane.b32.xlu0 %v108, 112
    %v865 = vpop.permute.xlu0 %864
    %866 = vrot.lane.b32.xlu0 %v109, 112
    %v867 = vpop.permute.xlu0 %866
    %868 = vrot.lane.b32.xlu0 %v110, 112
    %v869 = vpop.permute.xlu0 %868
    %870 = vrot.lane.b32.xlu0 %v111, 112
    %v871 = vpop.permute.xlu0 %870
    %876 = vrot.lane.b32.xlu0 %v253, 112
    %v877 = vpop.permute.xlu0 %876
    %v880 = vsel %vm119, %v859, 0
    %882 = vmatprep.subr.mxu0 0.0
    %883 = vmatpush1.msra.mxu0 %v865
    %884 = vmatprep.subr.mxu0 0.0
    %885 = vmatpush1.msra.mxu0 %v867
    %886 = vmatprep.subr.mxu0 0.0
    %887 = vmatpush1.msra.mxu0 %v869
    %888 = vmatprep.subr.mxu0 0.0
    %889 = vmatpush1.msra.mxu0 %v871
    %890 = vmatprep.subr.mxu0 0.0
    %891 = vmatpush1.msra.mxu0 0.0
    %892 = vmatprep.subr.mxu0 0.0
    %893 = vmatpush1.msra.mxu0 0.0
    %894 = vmatprep.subr.mxu0 0.0
    %895 = vmatpush1.msra.mxu0 0.0
    %896 = vmatprep.subr.mxu0 0.0
    %897 = vmatpush1.msra.mxu0 0.0
    %898 = vmatprep.subr.mxu0 0.0
    %899 = vmatpush1.msra.mxu0 0.0
    %900 = vmatprep.subr.mxu0 0.0
    %901 = vmatpush1.msra.mxu0 0.0
    %902 = vmatprep.subr.mxu0 0.0
    %903 = vmatpush1.msra.mxu0 0.0
    %904 = vmatprep.subr.mxu0 0.0
    %905 = vmatpush1.msra.mxu0 0.0
    %906 = vmatprep.subr.mxu0 0.0
    %907 = vmatpush1.msra.mxu0 0.0
    %908 = vmatprep.subr.mxu0 0.0
    %909 = vmatpush1.msra.mxu0 0.0
    %910 = vmatprep.subr.mxu0 0.0
    %911 = vmatpush1.msra.mxu0 0.0
    %912 = vmatprep.subr.mxu0 0.0
    %913 = vmatpush1.msra.mxu0 0.0
    %914 = vmatprep.subr.mxu0 0.0
    %915 = vmatpush1.msra.mxu0 0.0
    %916 = vmatprep.subr.mxu0 0.0
    %917 = vmatpush1.msra.mxu0 0.0
    %918 = vmatprep.subr.mxu0 0.0
    %919 = vmatpush1.msra.mxu0 0.0
    %920 = vmatprep.subr.mxu0 0.0
    %921 = vmatpush1.msra.mxu0 0.0
    %922 = vmatprep.subr.mxu0 0.0
    %923 = vmatpush1.msra.mxu0 0.0
    %924 = vmatprep.subr.mxu0 0.0
    %925 = vmatpush1.msra.mxu0 0.0
    %926 = vmatprep.subr.mxu0 0.0
    %927 = vmatpush1.msra.mxu0 0.0
    %928 = vmatprep.subr.mxu0 0.0
    %929 = vmatpush1.msra.mxu0 0.0
    %930 = vmatprep.subr.mxu0 0.0
    %931 = vmatpush1.msra.mxu0 0.0
    %932 = vmatprep.subr.mxu0 0.0
    %933 = vmatpush1.msra.mxu0 0.0
    %934 = vmatprep.subr.mxu0 0.0
    %935 = vmatpush1.msra.mxu0 0.0
    %936 = vmatprep.subr.mxu0 0.0
    %937 = vmatpush1.msra.mxu0 0.0
    %938 = vmatprep.subr.mxu0 0.0
    %939 = vmatpush1.msra.mxu0 0.0
    %940 = vmatprep.subr.mxu0 0.0
    %941 = vmatpush1.msra.mxu0 0.0
    %942 = vmatprep.subr.mxu0 0.0
    %943 = vmatpush1.msra.mxu0 0.0
    %944 = vmatprep.subr.mxu0 0.0
    %945 = vmatpush1.msra.mxu0 0.0
    %946 = vmatprep.mubr.f32.mxu0 0.0
    %947 = vmatmul.mubr.f32.gmra.mrb[0].mxu0 %v880
    %v948 = vpop.f32.mrb[0].mxu0
    %v949 = vadd.f32 %v877, %v948
    %v950 = vpop.f32.mrb[0].mxu0
    %951 = vdwg.mxu0
    %v953 = vcombine.high %v949, %v949
    %v955 = vunpack.c.l.s4 1966171168
    %v956 = vunpack.c.0.s8 %v955
    %v957 = vlaneseq
    %v958 = vshrl.u32 %v957, 7
    %v959 = vsub.s32 %v956, %v958
    %v960 = vrot.slane %v949, %v959
    %v962 = vunpack.c.l.s4 1966171168
    %v963 = vunpack.c.0.s8 %v962
    %v964 = vlaneseq
    %v965 = vshrl.u32 %v964, 7
    %v966 = vsub.s32 %v963, %v965
    %v967 = vrot.slane %v953, %v966
    %v968 = vcombine.high %v960, %v960
    %v969 = vcombine.high %v967, %v967
    %v971 = vunpack.c.l.s4 1966171168
    %v972 = vunpack.c.0.s8 %v971
    %v973 = vlaneseq
    %v974 = vshrl.u32 %v973, 7
    %v975 = vsub.s32 %v972, %v974
    %v976 = vrot.slane %v960, %v975
    %v978 = vunpack.c.l.s4 1966171168
    %v979 = vunpack.c.0.s8 %v978
    %v980 = vlaneseq
    %v981 = vshrl.u32 %v980, 7
    %v982 = vsub.s32 %v979, %v981
    %v983 = vrot.slane %v967, %v982
    %v985 = vunpack.c.l.s4 1966171168
    %v986 = vunpack.c.0.s8 %v985
    %v987 = vlaneseq
    %v988 = vshrl.u32 %v987, 7
    %v989 = vsub.s32 %v986, %v988
    %v990 = vrot.slane %v968, %v989
    %v992 = vunpack.c.l.s4 1966171168
    %v993 = vunpack.c.0.s8 %v992
    %v994 = vlaneseq
    %v995 = vshrl.u32 %v994, 7
    %v996 = vsub.s32 %v993, %v995
    %v997 = vrot.slane %v969, %v996
    %v998 = vcombine.high %v976, %v976
    %v999 = vcombine.high %v983, %v983
    %v1000 = vcombine.high %v990, %v990
    %v1001 = vcombine.high %v997, %v997
    %v1002 = vlaneseq
    %v1003 = vshrl.u32 %v1002, 7
    %v1004 = vsub.s32 0, %v1003
    %v1005 = vrot.slane %v976, %v1004
    %v1006 = vlaneseq
    %v1007 = vshrl.u32 %v1006, 7
    %v1008 = vsub.s32 0, %v1007
    %v1009 = vrot.slane %v990, %v1008
    %v1010 = vlaneseq
    %v1011 = vshrl.u32 %v1010, 7
    %v1012 = vsub.s32 0, %v1011
    %v1013 = vrot.slane %v998, %v1012
    %v1014 = vlaneseq
    %v1015 = vshrl.u32 %v1014, 7
    %v1016 = vsub.s32 0, %v1015
    %v1017 = vrot.slane %v1000, %v1016
    %v1018 = vlaneseq
    %v1019 = vshrl.u32 %v1018, 7
    %v1020 = vsub.s32 0, %v1019
    %v1021 = vrot.slane %v983, %v1020
    %v1022 = vlaneseq
    %v1023 = vshrl.u32 %v1022, 7
    %v1024 = vsub.s32 0, %v1023
    %v1025 = vrot.slane %v997, %v1024
    %v1026 = vlaneseq
    %v1027 = vshrl.u32 %v1026, 7
    %v1028 = vsub.s32 0, %v1027
    %v1029 = vrot.slane %v999, %v1028
    %v1030 = vlaneseq
    %v1031 = vshrl.u32 %v1030, 7
    %v1032 = vsub.s32 0, %v1031
    %v1033 = vrot.slane %v1001, %v1032
    %1050 = vrot.lane.b32.xlu0 %v211, 112
    %v1051 = vpop.permute.xlu0 %1050
    %1052 = vrot.lane.b32.xlu0 %v216, 112
    %v1053 = vpop.permute.xlu0 %1052
    %1054 = vrot.lane.b32.xlu0 %v221, 112
    %v1055 = vpop.permute.xlu0 %1054
    %1056 = vrot.lane.b32.xlu0 %v226, 112
    %v1057 = vpop.permute.xlu0 %1056
    %1058 = vrot.lane.b32.xlu0 %v231, 112
    %v1059 = vpop.permute.xlu0 %1058
    %1060 = vrot.lane.b32.xlu0 %v236, 112
    %v1061 = vpop.permute.xlu0 %1060
    %1062 = vrot.lane.b32.xlu0 %v241, 112
    %v1063 = vpop.permute.xlu0 %1062
    %1064 = vrot.lane.b32.xlu0 %v246, 112
    %v1065 = vpop.permute.xlu0 %1064
    %v1074 = vadd.f32 %v1005, %v1051
    %v1075 = vadd.f32 %v1009, %v1053
    %v1076 = vadd.f32 %v1013, %v1055
    %v1077 = vadd.f32 %v1017, %v1057
    %v1078 = vadd.f32 %v1021, %v1059
    %v1079 = vadd.f32 %v1025, %v1061
    %v1080 = vadd.f32 %v1029, %v1063
    %v1081 = vadd.f32 %v1033, %v1065
    %v1082 = vtanh.pop %v1074
    %v1083 = vtanh.pop %v1075
    %v1084 = vtanh.pop %v1076
    %v1085 = vtanh.pop %v1077
    %v1086 = vtanh.pop %v1078
    %v1087 = vtanh.pop %v1079
    %v1088 = vtanh.pop %v1080
    %v1089 = vtanh.pop %v1081
    %v1090 = vlaneseq
    %v1091 = vshrl.u32 %v1090, 7
    %v1092 = vsub.s32 1, %v1091
    %v1093 = vrot.slane %v113, %v1092
    %v1094 = vmul.f32 %v1082, %v1093
    %v1095 = vmul.f32 %v1083, %v1093
    %v1096 = vmul.f32 %v1084, %v1093
    %v1097 = vmul.f32 %v1085, %v1093
    %v1098 = vmul.f32 %v1086, %v1093
    %v1099 = vmul.f32 %v1087, %v1093
    %v1100 = vmul.f32 %v1088, %v1093
    %v1101 = vmul.f32 %v1089, %v1093
    %v1102 = vsel %vm446, %v1094, 0.0
    %1103 = vadd.xlane.f32.xlu0 %v1102
    %v1104 = vpop.xlane.xlu0 %1103
    %v1105 = vsel %vm446, %v1095, 0.0
    %1106 = vadd.xlane.f32.xlu0 %v1105
    %v1107 = vpop.xlane.xlu0 %1106
    %v1108 = vsel %vm446, %v1096, 0.0
    %1109 = vadd.xlane.f32.xlu0 %v1108
    %v1110 = vpop.xlane.xlu0 %1109
    %v1111 = vsel %vm446, %v1097, 0.0
    %1112 = vadd.xlane.f32.xlu0 %v1111
    %v1113 = vpop.xlane.xlu0 %1112
    %v1114 = vsel %vm446, %v1098, 0.0
    %1115 = vadd.xlane.f32.xlu0 %v1114
    %v1116 = vpop.xlane.xlu0 %1115
    %v1117 = vsel %vm446, %v1099, 0.0
    %1118 = vadd.xlane.f32.xlu0 %v1117
    %v1119 = vpop.xlane.xlu0 %1118
    %v1120 = vsel %vm446, %v1100, 0.0
    %1121 = vadd.xlane.f32.xlu0 %v1120
    %v1122 = vpop.xlane.xlu0 %1121
    %v1123 = vsel %vm446, %v1101, 0.0
    %1124 = vadd.xlane.f32.xlu0 %v1123
    %v1125 = vpop.xlane.xlu0 %1124
    %1126 = vset.pattern.permute.xlu0 1
    %1127 = vperm.xlu0 %1126, %v475
    %v1128 = vpop.permute.xlu0 %1127
    %v1130 = vadd.f32 %v1104, %v1128
    %v1131 = vadd.f32 %v1107, %v1128
    %v1132 = vadd.f32 %v1110, %v1128
    %v1133 = vadd.f32 %v1113, %v1128
    %v1134 = vadd.f32 %v1116, %v1128
    %v1135 = vadd.f32 %v1119, %v1128
    %v1136 = vadd.f32 %v1122, %v1128
    %v1137 = vadd.f32 %v1125, %v1128
    %v1146 = vlaneseq
    %v1147 = vshrl.u32 %v1146, 7
    %v1148 = vsub.s32 %v497, %v1147
    %v1149 = vrot.slane %v1130, %v1148
    %v1150 = vlaneseq
    %v1151 = vshrl.u32 %v1150, 7
    %v1152 = vsub.s32 %v497, %v1151
    %v1153 = vrot.slane %v1131, %v1152
    %v1154 = vlaneseq
    %v1155 = vshrl.u32 %v1154, 7
    %v1156 = vsub.s32 %v497, %v1155
    %v1157 = vrot.slane %v1132, %v1156
    %v1158 = vlaneseq
    %v1159 = vshrl.u32 %v1158, 7
    %v1160 = vsub.s32 %v497, %v1159
    %v1161 = vrot.slane %v1133, %v1160
    %v1162 = vlaneseq
    %v1163 = vshrl.u32 %v1162, 7
    %v1164 = vsub.s32 %v497, %v1163
    %v1165 = vrot.slane %v1134, %v1164
    %v1166 = vlaneseq
    %v1167 = vshrl.u32 %v1166, 7
    %v1168 = vsub.s32 %v497, %v1167
    %v1169 = vrot.slane %v1135, %v1168
    %v1170 = vlaneseq
    %v1171 = vshrl.u32 %v1170, 7
    %v1172 = vsub.s32 %v497, %v1171
    %v1173 = vrot.slane %v1136, %v1172
    %v1174 = vlaneseq
    %v1175 = vshrl.u32 %v1174, 7
    %v1176 = vsub.s32 %v497, %v1175
    %v1177 = vrot.slane %v1137, %v1176
    %v1178 = vsel %vm530, %v1153, %v1149
    %v1179 = vsel %vm532, %v1157, %v1178
    %v1180 = vsel %vm534, %v1161, %v1179
    %v1181 = vsel %vm536, %v1165, %v1180
    %v1182 = vsel %vm538, %v1169, %v1181
    %v1183 = vsel %vm540, %v1173, %v1182
    %v1184 = vsel %vm542, %v1177, %v1183
    %v1186 = vsel %vm545, %v1184, -inf
    %1187 = vmax.xlane.f32.xlu0 %v1186
    %v1188 = vpop.xlane.xlu0 %1187
    %v1190 = vlaneseq
    %v1191 = vshrl.u32 %v1190, 7
    %v1192 = vsub.s32 0, %v1191
    %v1193 = vrot.slane %v1188, %v1192
    %v1194 = vlaneseq
    %v1195 = vshrl.u32 %v1194, 7
    %v1196 = vsub.s32 1, %v1195
    %v1197 = vrot.slane %v1188, %v1196
    %v1198 = vlaneseq
    %v1199 = vshrl.u32 %v1198, 7
    %v1200 = vsub.s32 2, %v1199
    %v1201 = vrot.slane %v1188, %v1200
    %v1202 = vlaneseq
    %v1203 = vshrl.u32 %v1202, 7
    %v1204 = vsub.s32 3, %v1203
    %v1205 = vrot.slane %v1188, %v1204
    %v1206 = vlaneseq
    %v1207 = vshrl.u32 %v1206, 7
    %v1208 = vsub.s32 4, %v1207
    %v1209 = vrot.slane %v1188, %v1208
    %v1210 = vlaneseq
    %v1211 = vshrl.u32 %v1210, 7
    %v1212 = vsub.s32 5, %v1211
    %v1213 = vrot.slane %v1188, %v1212
    %v1214 = vlaneseq
    %v1215 = vshrl.u32 %v1214, 7
    %v1216 = vsub.s32 6, %v1215
    %v1217 = vrot.slane %v1188, %v1216
    %v1218 = vlaneseq
    %v1219 = vshrl.u32 %v1218, 7
    %v1220 = vsub.s32 7, %v1219
    %v1221 = vrot.slane %v1188, %v1220
    %v1230 = vsub.f32 %v1130, %v1193
    %v1231 = vsub.f32 %v1131, %v1197
    %v1232 = vsub.f32 %v1132, %v1201
    %v1233 = vsub.f32 %v1133, %v1205
    %v1234 = vsub.f32 %v1134, %v1209
    %v1235 = vsub.f32 %v1135, %v1213
    %v1236 = vsub.f32 %v1136, %v1217
    %v1237 = vsub.f32 %v1137, %v1221
    %v1238 = vmul.f32 %v1230, 1.442695
    %v1239 = vpow.pop %v1238
    %v1240 = vmul.f32 %v1231, 1.442695
    %v1241 = vpow.pop %v1240
    %v1242 = vmul.f32 %v1232, 1.442695
    %v1243 = vpow.pop %v1242
    %v1244 = vmul.f32 %v1233, 1.442695
    %v1245 = vpow.pop %v1244
    %v1246 = vmul.f32 %v1234, 1.442695
    %v1247 = vpow.pop %v1246
    %v1248 = vmul.f32 %v1235, 1.442695
    %v1249 = vpow.pop %v1248
    %v1250 = vmul.f32 %v1236, 1.442695
    %v1251 = vpow.pop %v1250
    %v1252 = vmul.f32 %v1237, 1.442695
    %v1253 = vpow.pop %v1252
    %1262 = vset.pattern.permute.xlu0 0
    %1263 = vperm.xlu0 %1262, %v1239
    %v1264 = vpop.permute.xlu0 %1263
    %1265 = vset.pattern.permute.xlu0 0
    %1266 = vperm.xlu0 %1265, %v1241
    %v1267 = vpop.permute.xlu0 %1266
    %1268 = vset.pattern.permute.xlu0 0
    %1269 = vperm.xlu0 %1268, %v1243
    %v1270 = vpop.permute.xlu0 %1269
    %1271 = vset.pattern.permute.xlu0 0
    %1272 = vperm.xlu0 %1271, %v1245
    %v1273 = vpop.permute.xlu0 %1272
    %1274 = vset.pattern.permute.xlu0 0
    %1275 = vperm.xlu0 %1274, %v1247
    %v1276 = vpop.permute.xlu0 %1275
    %1277 = vset.pattern.permute.xlu0 0
    %1278 = vperm.xlu0 %1277, %v1249
    %v1279 = vpop.permute.xlu0 %1278
    %1280 = vset.pattern.permute.xlu0 0
    %1281 = vperm.xlu0 %1280, %v1251
    %v1282 = vpop.permute.xlu0 %1281
    %1283 = vset.pattern.permute.xlu0 0
    %1284 = vperm.xlu0 %1283, %v1253
    %v1285 = vpop.permute.xlu0 %1284
    %v1286 = vlaneseq
    %v1287 = vshrl.u32 %v1286, 7
    %v1288 = vsub.s32 %v497, %v1287
    %v1289 = vrot.slane %v1264, %v1288
    %v1290 = vlaneseq
    %v1291 = vshrl.u32 %v1290, 7
    %v1292 = vsub.s32 %v497, %v1291
    %v1293 = vrot.slane %v1267, %v1292
    %v1294 = vlaneseq
    %v1295 = vshrl.u32 %v1294, 7
    %v1296 = vsub.s32 %v497, %v1295
    %v1297 = vrot.slane %v1270, %v1296
    %v1298 = vlaneseq
    %v1299 = vshrl.u32 %v1298, 7
    %v1300 = vsub.s32 %v497, %v1299
    %v1301 = vrot.slane %v1273, %v1300
    %v1302 = vlaneseq
    %v1303 = vshrl.u32 %v1302, 7
    %v1304 = vsub.s32 %v497, %v1303
    %v1305 = vrot.slane %v1276, %v1304
    %v1306 = vlaneseq
    %v1307 = vshrl.u32 %v1306, 7
    %v1308 = vsub.s32 %v497, %v1307
    %v1309 = vrot.slane %v1279, %v1308
    %v1310 = vlaneseq
    %v1311 = vshrl.u32 %v1310, 7
    %v1312 = vsub.s32 %v497, %v1311
    %v1313 = vrot.slane %v1282, %v1312
    %v1314 = vlaneseq
    %v1315 = vshrl.u32 %v1314, 7
    %v1316 = vsub.s32 %v497, %v1315
    %v1317 = vrot.slane %v1285, %v1316
    %v1318 = vsel %vm530, %v1293, %v1289
    %v1319 = vsel %vm532, %v1297, %v1318
    %v1320 = vsel %vm534, %v1301, %v1319
    %v1321 = vsel %vm536, %v1305, %v1320
    %v1322 = vsel %vm538, %v1309, %v1321
    %v1323 = vsel %vm540, %v1313, %v1322
    %v1324 = vsel %vm542, %v1317, %v1323
    %v1326 = vsel %vm545, %v1324, 0.0
    %1327 = vadd.xlane.f32.xlu0 %v1326
    %v1328 = vpop.xlane.xlu0 %1327
    %v1329 = vrcp.pop %v1328
    %v1331 = vlaneseq
    %v1332 = vshrl.u32 %v1331, 7
    %v1333 = vsub.s32 0, %v1332
    %v1334 = vrot.slane %v1329, %v1333
    %v1335 = vlaneseq
    %v1336 = vshrl.u32 %v1335, 7
    %v1337 = vsub.s32 1, %v1336
    %v1338 = vrot.slane %v1329, %v1337
    %v1339 = vlaneseq
    %v1340 = vshrl.u32 %v1339, 7
    %v1341 = vsub.s32 2, %v1340
    %v1342 = vrot.slane %v1329, %v1341
    %v1343 = vlaneseq
    %v1344 = vshrl.u32 %v1343, 7
    %v1345 = vsub.s32 3, %v1344
    %v1346 = vrot.slane %v1329, %v1345
    %v1347 = vlaneseq
    %v1348 = vshrl.u32 %v1347, 7
    %v1349 = vsub.s32 4, %v1348
    %v1350 = vrot.slane %v1329, %v1349
    %v1351 = vlaneseq
    %v1352 = vshrl.u32 %v1351, 7
    %v1353 = vsub.s32 5, %v1352
    %v1354 = vrot.slane %v1329, %v1353
    %v1355 = vlaneseq
    %v1356 = vshrl.u32 %v1355, 7
    %v1357 = vsub.s32 6, %v1356
    %v1358 = vrot.slane %v1329, %v1357
    %v1359 = vlaneseq
    %v1360 = vshrl.u32 %v1359, 7
    %v1361 = vsub.s32 7, %v1360
    %v1362 = vrot.slane %v1329, %v1361
    %v1371 = vmul.f32 %v1239, %v1334
    %v1372 = vmul.f32 %v1241, %v1338
    %v1373 = vmul.f32 %v1243, %v1342
    %v1374 = vmul.f32 %v1245, %v1346
    %v1375 = vmul.f32 %v1247, %v1350
    %v1376 = vmul.f32 %v1249, %v1354
    %v1377 = vmul.f32 %v1251, %v1358
    %v1378 = vmul.f32 %v1253, %v1362
    %1380 = vset.pattern.permute.xlu0 0
    %1381 = vperm.xlu0 %1380, %v1371
    %v1382 = vpop.permute.xlu0 %1381
    %1385 = vset.pattern.permute.xlu0 0
    %1386 = vperm.xlu0 %1385, %v1372
    %v1387 = vpop.permute.xlu0 %1386
    %1390 = vset.pattern.permute.xlu0 0
    %1391 = vperm.xlu0 %1390, %v1373
    %v1392 = vpop.permute.xlu0 %1391
    %1395 = vset.pattern.permute.xlu0 0
    %1396 = vperm.xlu0 %1395, %v1374
    %v1397 = vpop.permute.xlu0 %1396
    %1400 = vset.pattern.permute.xlu0 0
    %1401 = vperm.xlu0 %1400, %v1375
    %v1402 = vpop.permute.xlu0 %1401
    %1405 = vset.pattern.permute.xlu0 0
    %1406 = vperm.xlu0 %1405, %v1376
    %v1407 = vpop.permute.xlu0 %1406
    %1410 = vset.pattern.permute.xlu0 0
    %1411 = vperm.xlu0 %1410, %v1377
    %v1412 = vpop.permute.xlu0 %1411
    %1415 = vset.pattern.permute.xlu0 0
    %1416 = vperm.xlu0 %1415, %v1378
    %v1417 = vpop.permute.xlu0 %1416
    %v1419 = vmul.f32 %v1382, %v100
    %v1420 = vmul.f32 %v1387, %v101
    %v1421 = vmul.f32 %v1392, %v102
    %v1422 = vmul.f32 %v1397, %v103
    %v1423 = vmul.f32 %v1402, %v104
    %v1424 = vmul.f32 %v1407, %v105
    %v1425 = vmul.f32 %v1412, %v106
    %v1426 = vmul.f32 %v1417, %v107
    %v1427 = vsel %vm119, %v1419, 0.0
    %v1428 = vrot.slane %v1427, 4
    %v1429 = vadd.f32 %v1427, %v1428
    %v1430 = vrot.slane %v1429, 2
    %v1431 = vadd.f32 %v1429, %v1430
    %v1432 = vrot.slane %v1431, 1
    %v1433 = vadd.f32 %v1431, %v1432
    %v1434 = vsel %vm119, %v1420, 0.0
    %v1435 = vrot.slane %v1434, 4
    %v1436 = vadd.f32 %v1434, %v1435
    %v1437 = vrot.slane %v1436, 2
    %v1438 = vadd.f32 %v1436, %v1437
    %v1439 = vrot.slane %v1438, 1
    %v1440 = vadd.f32 %v1438, %v1439
    %v1441 = vsel %vm119, %v1421, 0.0
    %v1442 = vrot.slane %v1441, 4
    %v1443 = vadd.f32 %v1441, %v1442
    %v1444 = vrot.slane %v1443, 2
    %v1445 = vadd.f32 %v1443, %v1444
    %v1446 = vrot.slane %v1445, 1
    %v1447 = vadd.f32 %v1445, %v1446
    %v1448 = vsel %vm119, %v1422, 0.0
    %v1449 = vrot.slane %v1448, 4
    %v1450 = vadd.f32 %v1448, %v1449
    %v1451 = vrot.slane %v1450, 2
    %v1452 = vadd.f32 %v1450, %v1451
    %v1453 = vrot.slane %v1452, 1
    %v1454 = vadd.f32 %v1452, %v1453
    %v1455 = vsel %vm119, %v1423, 0.0
    %v1456 = vrot.slane %v1455, 4
    %v1457 = vadd.f32 %v1455, %v1456
    %v1458 = vrot.slane %v1457, 2
    %v1459 = vadd.f32 %v1457, %v1458
    %v1460 = vrot.slane %v1459, 1
    %v1461 = vadd.f32 %v1459, %v1460
    %v1462 = vsel %vm119, %v1424, 0.0
    %v1463 = vrot.slane %v1462, 4
    %v1464 = vadd.f32 %v1462, %v1463
    %v1465 = vrot.slane %v1464, 2
    %v1466 = vadd.f32 %v1464, %v1465
    %v1467 = vrot.slane %v1466, 1
    %v1468 = vadd.f32 %v1466, %v1467
    %v1469 = vsel %vm119, %v1425, 0.0
    %v1470 = vrot.slane %v1469, 4
    %v1471 = vadd.f32 %v1469, %v1470
    %v1472 = vrot.slane %v1471, 2
    %v1473 = vadd.f32 %v1471, %v1472
    %v1474 = vrot.slane %v1473, 1
    %v1475 = vadd.f32 %v1473, %v1474
    %v1476 = vsel %vm119, %v1426, 0.0
    %v1477 = vrot.slane %v1476, 4
    %v1478 = vadd.f32 %v1476, %v1477
    %v1479 = vrot.slane %v1478, 2
    %v1480 = vadd.f32 %v1478, %v1479
    %v1481 = vrot.slane %v1480, 1
    %v1482 = vadd.f32 %v1480, %v1481
    %v1491 = vsel %vm530, %v1440, %v1433
    %v1492 = vsel %vm532, %v1447, %v1491
    %v1493 = vsel %vm534, %v1454, %v1492
    %v1494 = vsel %vm536, %v1461, %v1493
    %v1495 = vsel %vm538, %v1468, %v1494
    %v1496 = vsel %vm540, %v1475, %v1495
    %v1497 = vsel %vm542, %v1482, %v1496
    %v1499 = vadd.f32 %v859, %v1497
    %v1500 = vld [vmem:[#allocation10] sm:$0xff]
    %v1501 = vld [vmem:[#allocation10 + $0x8] sm:$0xff]
    %v1502 = vld [vmem:[#allocation10 + $0x10] sm:$0xff]
    %v1503 = vld [vmem:[#allocation10 + $0x18] sm:$0xff]
    %v1504 = vld [vmem:[%s8] sm:$0x1]
    %v1506 = vlaneseq
    %v1507 = vshrl.u32 %v1506, 7
    %v1508 = vsub.s32 0, %v1507
    %v1509 = vrot.slane %v1504, %v1508
    %v1512 = vsel %vm119, %v1499, 0
    %1514 = vmatprep.subr.mxu0 0.0
    %1515 = vmatpush1.msra.mxu0 %v1500
    %1516 = vmatprep.subr.mxu0 0.0
    %1517 = vmatpush1.msra.mxu0 %v1501
    %1518 = vmatprep.subr.mxu0 0.0
    %1519 = vmatpush1.msra.mxu0 %v1502
    %1520 = vmatprep.subr.mxu0 0.0
    %1521 = vmatpush1.msra.mxu0 %v1503
    %1522 = vmatprep.subr.mxu0 0.0
    %1523 = vmatpush1.msra.mxu0 0.0
    %1524 = vmatprep.subr.mxu0 0.0
    %1525 = vmatpush1.msra.mxu0 0.0
    %1526 = vmatprep.subr.mxu0 0.0
    %1527 = vmatpush1.msra.mxu0 0.0
    %1528 = vmatprep.subr.mxu0 0.0
    %1529 = vmatpush1.msra.mxu0 0.0
    %1530 = vmatprep.subr.mxu0 0.0
    %1531 = vmatpush1.msra.mxu0 0.0
    %1532 = vmatprep.subr.mxu0 0.0
    %1533 = vmatpush1.msra.mxu0 0.0
    %1534 = vmatprep.subr.mxu0 0.0
    %1535 = vmatpush1.msra.mxu0 0.0
    %1536 = vmatprep.subr.mxu0 0.0
    %1537 = vmatpush1.msra.mxu0 0.0
    %1538 = vmatprep.subr.mxu0 0.0
    %1539 = vmatpush1.msra.mxu0 0.0
    %1540 = vmatprep.subr.mxu0 0.0
    %1541 = vmatpush1.msra.mxu0 0.0
    %1542 = vmatprep.subr.mxu0 0.0
    %1543 = vmatpush1.msra.mxu0 0.0
    %1544 = vmatprep.subr.mxu0 0.0
    %1545 = vmatpush1.msra.mxu0 0.0
    %1546 = vmatprep.subr.mxu0 0.0
    %1547 = vmatpush1.msra.mxu0 0.0
    %1548 = vmatprep.subr.mxu0 0.0
    %1549 = vmatpush1.msra.mxu0 0.0
    %1550 = vmatprep.subr.mxu0 0.0
    %1551 = vmatpush1.msra.mxu0 0.0
    %1552 = vmatprep.subr.mxu0 0.0
    %1553 = vmatpush1.msra.mxu0 0.0
    %1554 = vmatprep.subr.mxu0 0.0
    %1555 = vmatpush1.msra.mxu0 0.0
    %1556 = vmatprep.subr.mxu0 0.0
    %1557 = vmatpush1.msra.mxu0 0.0
    %1558 = vmatprep.subr.mxu0 0.0
    %1559 = vmatpush1.msra.mxu0 0.0
    %1560 = vmatprep.subr.mxu0 0.0
    %1561 = vmatpush1.msra.mxu0 0.0
    %1562 = vmatprep.subr.mxu0 0.0
    %1563 = vmatpush1.msra.mxu0 0.0
    %1564 = vmatprep.subr.mxu0 0.0
    %1565 = vmatpush1.msra.mxu0 0.0
    %1566 = vmatprep.subr.mxu0 0.0
    %1567 = vmatpush1.msra.mxu0 0.0
    %1568 = vmatprep.subr.mxu0 0.0
    %1569 = vmatpush1.msra.mxu0 0.0
    %1570 = vmatprep.subr.mxu0 0.0
    %1571 = vmatpush1.msra.mxu0 0.0
    %1572 = vmatprep.subr.mxu0 0.0
    %1573 = vmatpush1.msra.mxu0 0.0
    %1574 = vmatprep.subr.mxu0 0.0
    %1575 = vmatpush1.msra.mxu0 0.0
    %1576 = vmatprep.subr.mxu0 0.0
    %1577 = vmatpush1.msra.mxu0 0.0
    %1578 = vmatprep.mubr.f32.mxu0 0.0
    %1579 = vmatmul.mubr.f32.gmra.mrb[0].mxu0 %v1512
    %v1580 = vpop.f32.mrb[0].mxu0
    %v1581 = vadd.f32 %v1509, %v1580
    %v1582 = vpop.f32.mrb[0].mxu0
    %1583 = vdwg.mxu0
    %1584 = vst [vmem:[#allocation11] sm:$0xff] %v1581
    // Predicated region
    $region58: #{tpu_custom_call.1} parent=1 // pred_check
      _
    $region59: #{tpu_custom_call.1} parent=1 // pred_check_branch
      %1586 = sbr.rel (0) target = $region61
    $region60: #{tpu_custom_call.1} parent=1 // pred_region
      %s1588 = ssub.s32 128, 128
      %1589 = vsyncadd [#allocation4], %s1588
      %s1591 = sshll.u32 [#allocation11], 4
      %s1592 = int_to_ptr.vmem [resolvable:$true] %s1591
      %1594 = dma.vmem_to_hbm [thread:$0]  %s1592, 128, %s9, [#allocation4]
    $region61: #{tpu_custom_call.1} parent=1 // pred_fallthru
      _
    // Predicated region
    $region62: #{tpu_custom_call.1} parent=1 // pred_check
      _
    $region63: #{tpu_custom_call.1} parent=1 // pred_check_branch
      %1596 = sbr.rel (0) target = $region65
    $region64: #{tpu_custom_call.1} parent=1 // pred_region
      %1597 = dma.done [#allocation4], 128
    $region65: #{tpu_custom_call.1} parent=1 // pred_fallthru
      _
    %1598 = vsyncpa [#allocation3], 1
    %1599 = vsyncpa [#allocation6], 1
    %1600 = vsyncpa [#allocation9], 1
    %1601 = vsyncpa [#allocation4], 1

</llo_original>
